<compile_context>
chip_gen: v6e
topology: v6e:2x2x1
jax: 0.10.0
libtpu: 0.0.40
codegen_flags: <defaults>
</compile_context>

<pallas_src>
import functools

import jax
import jax.numpy as jnp
from jax.experimental import pallas as pl
from jax.experimental.pallas import tpu as pltpu

LN_EPS = 1e-12
LANE = 128


def _layernorm(x, g, b):
    mu = jnp.mean(x, axis=-1, keepdims=True)
    var = jnp.mean((x - mu) ** 2, axis=-1, keepdims=True)
    return (x - mu) * jax.lax.rsqrt(var + LN_EPS) * g + b


def _gelu(x):
    # TODO(synk): HF ELECTRA uses exact erf-GELU; tanh approximation used here
    # (EUP/tanh has a guaranteed Mosaic lowering; small numerical difference).
    return jax.nn.gelu(x, approximate=True)


def electra_kernel(num_heads, row_chunk,
                   emb_ref, mask_ref,
                   wqkv_ref, bqkv_ref, wo_ref, bo_ref,
                   ln1g_ref, ln1b_ref,
                   w1_ref, b1_ref, w2_ref, b2_ref,
                   ln2g_ref, ln2b_ref,
                   hw_ref, hb_ref,
                   logits_ref,
                   hid_ref):
    layer = pl.program_id(1)             # layer index ("arbitrary")
    num_layers = pl.num_programs(1)

    bt, seq, hidden = emb_ref.shape
    rows = bt * seq
    hd = hidden // num_heads

    # Layer 0 of this batch tile: initialize the persistent hidden state from
    # the (auto-pipelined, bf16) embedding block.
    @pl.when(layer == 0)
    def _():
        hid_ref[...] = emb_ref[...].astype(jnp.float32).reshape(rows, hidden)

    x2 = hid_ref[...]                                      # (rows, H) f32

    # ---- fused QKV projection: one 2-D MXU pass with N = 3H -----------------
    qkv2 = (jnp.dot(x2.astype(jnp.bfloat16), wqkv_ref[0],
                    preferred_element_type=jnp.float32) + bqkv_ref[0])
    qkv = qkv2.astype(jnp.bfloat16).reshape(bt, seq, 3 * hidden)

    mask = mask_ref[...]                                   # (bt, 1, S) bias

    # ---- multi-head self-attention ------------------------------------------
    # Per-head context folded directly into the output projection:
    #   ctx @ Wo == sum_h ctx_h @ Wo[h*hd:(h+1)*hd, :]
    # so no ctx scratch and no sub-128-lane masked stores.
    # TODO(synk): at production head counts batch all heads into one einsum
    # batch dim ((bt*nh, S, hd) contraction) for full MXU K-width; kept as a
    # static per-head loop here for robust Mosaic lowering at tiny head dims.
    wo = wo_ref[0]                                         # (H, H) bf16
    attn2 = jnp.zeros((rows, hidden), jnp.float32)
    for h in range(num_heads):
        lo = h * hd
        qh = qkv[:, :, lo:lo + hd]                         # scale pre-folded
        kh = qkv[:, :, hidden + lo:hidden + lo + hd]
        vh = qkv[:, :, 2 * hidden + lo:2 * hidden + lo + hd]
        s = jnp.einsum('bqd,bkd->bqk', qh, kh,
                       preferred_element_type=jnp.float32) + mask
        s = s - jnp.max(s, axis=-1, keepdims=True)
        p = jnp.exp(s)
        p = p * pl.reciprocal(jnp.sum(p, axis=-1, keepdims=True), approx=True)
        ctx_h = jnp.einsum('bqk,bkd->bqd', p.astype(jnp.bfloat16), vh,
                           preferred_element_type=jnp.float32)
        attn2 = attn2 + jnp.dot(
            ctx_h.reshape(rows, hd).astype(jnp.bfloat16), wo[lo:lo + hd, :],
            preferred_element_type=jnp.float32)

    x2 = _layernorm(x2 + attn2 + bo_ref[0], ln1g_ref[0], ln1b_ref[0])

    # ---- feed-forward, chunked over rows so the GELU intermediate is bounded -
    n_chunks = rows // row_chunk
    for c in range(n_chunks):
        r0 = c * row_chunk
        xc = x2[r0:r0 + row_chunk, :]
        h1 = _gelu(jnp.dot(xc.astype(jnp.bfloat16), w1_ref[0],
                           preferred_element_type=jnp.float32) + b1_ref[0])
        ffn = jnp.dot(h1.astype(jnp.bfloat16), w2_ref[0],
                      preferred_element_type=jnp.float32) + b2_ref[0]
        hid_ref[r0:r0 + row_chunk, :] = _layernorm(
            xc + ffn, ln2g_ref[0], ln2b_ref[0])

    # ---- regression head on the [CLS] token, last layer only -----------------
    @pl.when(layer == num_layers - 1)
    def _():
        x3 = hid_ref[...].reshape(bt, seq, hidden)
        cls = x3[:, 0, :]                                           # (bt, H)
        logit = (jnp.sum(cls * hw_ref[...], axis=-1, keepdims=True)
                 + hb_ref[0, 0])                                    # (bt, 1)
        logits_ref[...] = jnp.broadcast_to(logit[None], logits_ref.shape)


def _vmem_cap_bytes():
    try:
        cap = int(pltpu.get_tpu_info().vmem_capacity_bytes)
        if cap > 0:
            return cap
    except Exception:
        pass
    return 64 * 2**20            # conservative: v7x per-TensorCore VMEM


def _largest_divisor_leq(n, cap):
    best = 1
    for d in range(1, min(n, cap) + 1):
        if n % d == 0:
            best = d
    return best


def _pick_batch_tile(B, S, H, I):
    """Largest batch tile whose per-tile activations fit comfortably in VMEM,
    while keeping >=2 tiles (when possible) so the "parallel" batch axis can
    feed v7x's second TensorCore."""
    cap = _vmem_cap_bytes()
    # double-buffered bf16 per-layer weight slab (the fixed VMEM cost)
    wslab = 2 * ((3 * H * H + H * H + 2 * H * I) * 2 + (9 * H + I) * 4)
    budget = max(2 * 2**20, (cap - wslab) // 2 - 8 * 2**20)
    per_row = (H * 4            # f32 hidden-state scratch
               + 2 * H * 2      # double-buffered bf16 embedding block
               + 3 * H * (2 + 4)  # qkv (bf16 value + f32 accum)
               + 3 * H * 4      # residual / attention accumulators
               + 2 * S * 4)     # one head's scores / probs
    bt_cap = max(1, int(budget // max(per_row * S, 1)))
    divisors = [d for d in range(1, B + 1) if B % d == 0]
    ok = [d for d in divisors if d <= bt_cap] or [1]
    bt = max(ok)
    if B // bt < 2:              # prefer >=2 tiles for the parallel axis (v7x)
        smaller = [d for d in ok if B // d >= 2]
        if smaller:
            bt = max(smaller)
    return bt


def init_params(key, vocab=128, hidden=32, num_layers=2, num_heads=4,
                intermediate=64, max_pos=64):
    ks = jax.random.split(key, 10)
    std = 0.02
    nrm = lambda k, shape: std * jax.random.normal(k, shape, jnp.float32)
    L, H, I = num_layers, hidden, intermediate
    return dict(
        num_heads=num_heads,
        word_emb=nrm(ks[0], (vocab, H)),
        pos_emb=nrm(ks[1], (max_pos, H)),
        type_emb=nrm(ks[2], (2, H)),
        emb_ln_g=jnp.ones((1, H), jnp.float32),
        emb_ln_b=jnp.zeros((1, H), jnp.float32),
        wq=nrm(ks[3], (L, H, H)), bq=jnp.zeros((L, 1, H), jnp.float32),
        wk=nrm(ks[4], (L, H, H)), bk=jnp.zeros((L, 1, H), jnp.float32),
        wv=nrm(ks[5], (L, H, H)), bv=jnp.zeros((L, 1, H), jnp.float32),
        wo=nrm(ks[6], (L, H, H)), bo=jnp.zeros((L, 1, H), jnp.float32),
        ln1_g=jnp.ones((L, 1, H), jnp.float32),
        ln1_b=jnp.zeros((L, 1, H), jnp.float32),
        w1=nrm(ks[7], (L, H, I)), b1=jnp.zeros((L, 1, I), jnp.float32),
        w2=nrm(ks[8], (L, I, H)), b2=jnp.zeros((L, 1, H), jnp.float32),
        ln2_g=jnp.ones((L, 1, H), jnp.float32),
        ln2_b=jnp.zeros((L, 1, H), jnp.float32),
        head_w=nrm(ks[9], (1, H)),
        head_b=jnp.zeros((1, 1), jnp.float32),
    )


def kcelectra_forward(params, input_ids, attention_mask, labels=None,
                      batch_tile=None):
    B, S = input_ids.shape
    H = params['word_emb'].shape[1]
    L = params['wq'].shape[0]
    I = params['w1'].shape[2]
    nh = params['num_heads']
    hd = H // nh

    # ---- embedding gathers + embedding LayerNorm in plain JAX ----------------
    # Stored bf16 in HBM so the per-tile pipelined load is half-width (v5e).
    emb = (params['word_emb'][input_ids]
           + params['pos_emb'][:S][None, :, :]
           + params['type_emb'][0][None, None, :]).astype(jnp.float32)
    emb = _layernorm(emb, params['emb_ln_g'],
                     params['emb_ln_b']).astype(jnp.bfloat16)      # (B, S, H)

    mask_bias = ((1.0 - attention_mask.astype(jnp.float32))[:, None, :]
                 * jnp.float32(-1e9))                              # (B, 1, S)

    # ---- pack per-layer weights: fused QKV (scale folded into Q), bf16 -------
    scale = jnp.float32(1.0 / (hd ** 0.5))
    wqkv = jnp.concatenate(
        [params['wq'] * scale, params['wk'], params['wv']], axis=-1
    ).astype(jnp.bfloat16)                                         # (L, H, 3H)
    bqkv = jnp.concatenate(
        [params['bq'] * scale, params['bk'], params['bv']], axis=-1)  # f32
    wo = params['wo'].astype(jnp.bfloat16)
    w1 = params['w1'].astype(jnp.bfloat16)
    w2 = params['w2'].astype(jnp.bfloat16)

    Bt = batch_tile if batch_tile is not None else _pick_batch_tile(B, S, H, I)
    assert B % Bt == 0
    nb = B // Bt
    rows = Bt * S
    row_chunk = _largest_divisor_leq(rows, 256)
    if rows // row_chunk > 64:        # avoid pathological unrolls
        row_chunk = rows

    kernel = functools.partial(electra_kernel, nh, row_chunk)

    per_layer = lambda a: pl.BlockSpec((1,) + a.shape[1:],
                                       lambda bi, li: (li, 0, 0))
    in_specs = [
        pl.BlockSpec((Bt, S, H), lambda bi, li: (bi, 0, 0)),   # embeddings
        pl.BlockSpec((Bt, 1, S), lambda bi, li: (bi, 0, 0)),   # mask bias
        per_layer(wqkv), per_layer(bqkv),
        per_layer(wo), per_layer(params['bo']),
        per_layer(params['ln1_g']), per_layer(params['ln1_b']),
        per_layer(w1), per_layer(params['b1']),
        per_layer(w2), per_layer(params['b2']),
        per_layer(params['ln2_g']), per_layer(params['ln2_b']),
        pl.BlockSpec((1, H), lambda bi, li: (0, 0)),           # head_w
        pl.BlockSpec(memory_space=pltpu.MemorySpace.SMEM),     # head_b scalar
    ]
    out_specs = pl.BlockSpec((1, Bt, LANE), lambda bi, li: (bi, 0, 0))

    # VMEM budget: double-buffered layer slab + embedding blocks + activations,
    # clamped to the chip's actual VMEM capacity minus headroom.
    f32b, bf16b = 4, 2
    wslab = ((3 * H * H + H * H + 2 * H * I) * bf16b
             + (3 * H + 6 * H + I) * f32b)
    act = (rows * 3 * H * (bf16b + f32b) + 3 * rows * H * f32b
           + 2 * Bt * S * S * f32b + 2 * row_chunk * I * f32b)
    est = (2 * wslab + 2 * rows * H * bf16b + 2 * Bt * S * f32b
           + rows * H * f32b + act + 2 * Bt * LANE * f32b)
    cap = _vmem_cap_bytes()
    vmem_limit = int(max(16 * 2**20,
                         min(cap - 8 * 2**20, max(32 * 2**20, 2 * est))))

    out = pl.pallas_call(
        kernel,
        out_shape=jax.ShapeDtypeStruct((nb, Bt, LANE), jnp.float32),
        grid_spec=pltpu.PrefetchScalarGridSpec(
            num_scalar_prefetch=0,
            grid=(nb, L),
            in_specs=in_specs,
            out_specs=out_specs,
            scratch_shapes=[
                pltpu.VMEM((rows, H), jnp.float32),   # persistent hidden state
            ]),
        compiler_params=pltpu.CompilerParams(
            dimension_semantics=("parallel", "arbitrary"),
            vmem_limit_bytes=vmem_limit),
    )(emb, mask_bias,
      wqkv, bqkv, wo, params['bo'],
      params['ln1_g'], params['ln1_b'],
      w1, params['b1'], w2, params['b2'],
      params['ln2_g'], params['ln2_b'],
      params['head_w'], params['head_b'])

    logits = jnp.squeeze(out.reshape(B, LANE)[:, :1])   # matches torch .squeeze()
    loss = None
    if labels is not None:
        loss = jnp.mean((logits - labels) ** 2)         # nn.MSELoss()
    return logits, loss


if __name__ == "__main__":
    key = jax.random.PRNGKey(0)
    pk, ik, lk = jax.random.split(key, 3)
    params = init_params(pk, vocab=128, hidden=32, num_layers=2,
                         num_heads=4, intermediate=64, max_pos=64)

    B, S = 2, 8
    input_ids = jax.random.randint(ik, (B, S), 0, 128, dtype=jnp.int32)
    attention_mask = jnp.ones((B, S), jnp.int32).at[1, 6:].set(0)  # pad seq 1 tail
    labels = jax.random.normal(lk, (B,), jnp.float32)

    logits, loss = kcelectra_forward(params, input_ids, attention_mask, labels)
    jax.block_until_ready((logits, loss))

    assert logits.shape == (B,)
    assert bool(jnp.all(jnp.isfinite(logits)))
    assert bool(jnp.isfinite(loss))
    print("KERNEL_OK")
</pallas_src>

<mosaic_0001>
module attributes {stable_mosaic.version = 11 : i64} {
  func.func @electra_kernel(%arg0: i32, %arg1: i32, %arg2: memref<1x8x32xbf16, #tpu.memory_space<vmem>>, %arg3: memref<1x1x8xf32, #tpu.memory_space<vmem>>, %arg4: memref<1x32x96xbf16, #tpu.memory_space<vmem>>, %arg5: memref<1x1x96xf32, #tpu.memory_space<vmem>>, %arg6: memref<1x32x32xbf16, #tpu.memory_space<vmem>>, %arg7: memref<1x1x32xf32, #tpu.memory_space<vmem>>, %arg8: memref<1x1x32xf32, #tpu.memory_space<vmem>>, %arg9: memref<1x1x32xf32, #tpu.memory_space<vmem>>, %arg10: memref<1x32x64xbf16, #tpu.memory_space<vmem>>, %arg11: memref<1x1x64xf32, #tpu.memory_space<vmem>>, %arg12: memref<1x64x32xbf16, #tpu.memory_space<vmem>>, %arg13: memref<1x1x32xf32, #tpu.memory_space<vmem>>, %arg14: memref<1x1x32xf32, #tpu.memory_space<vmem>>, %arg15: memref<1x1x32xf32, #tpu.memory_space<vmem>>, %arg16: memref<1x32xf32, #tpu.memory_space<vmem>>, %arg17: memref<1x1xf32, #tpu.memory_space<smem>>, %arg18: memref<1x1x128xf32, #tpu.memory_space<vmem>>, %arg19: memref<8x32xf32, #tpu.memory_space<vmem>>) attributes {dimension_semantics = [#tpu.dimension_semantics<parallel>, #tpu.dimension_semantics<arbitrary>], iteration_bounds = array<i64: 2, 2>, scalar_prefetch = 0 : i64, scratch_operands = 1 : i64, tpu.core_type = #tpu.core_type<tc>, window_params = [{transform_indices = @transform_0, window_bounds = array<i64: 1, 8, 32>}, {transform_indices = @transform_1, window_bounds = array<i64: 1, 1, 8>}, {transform_indices = @transform_2, window_bounds = array<i64: 1, 32, 96>}, {transform_indices = @transform_3, window_bounds = array<i64: 1, 1, 96>}, {transform_indices = @transform_4, window_bounds = array<i64: 1, 32, 32>}, {transform_indices = @transform_5, window_bounds = array<i64: 1, 1, 32>}, {transform_indices = @transform_6, window_bounds = array<i64: 1, 1, 32>}, {transform_indices = @transform_7, window_bounds = array<i64: 1, 1, 32>}, {transform_indices = @transform_8, window_bounds = array<i64: 1, 32, 64>}, {transform_indices = @transform_9, window_bounds = array<i64: 1, 1, 64>}, {transform_indices = @transform_10, window_bounds = array<i64: 1, 64, 32>}, {transform_indices = @transform_11, window_bounds = array<i64: 1, 1, 32>}, {transform_indices = @transform_12, window_bounds = array<i64: 1, 1, 32>}, {transform_indices = @transform_13, window_bounds = array<i64: 1, 1, 32>}, {pipeline_mode = #tpu.pipeline_mode<synchronous>, transform_indices = @transform_14, window_bounds = array<i64: 1, 32>}, {transform_indices = @transform_15, window_bounds = array<i64: 1, 1>}, {transform_indices = @transform_16, window_bounds = array<i64: 1, 1, 128>}]} {
    %c0_i32 = arith.constant 0 : i32
    %0 = arith.cmpi eq, %arg1, %c0_i32 : i32
    %1 = arith.extui %0 : i1 to i32
    %c0_i32_0 = arith.constant 0 : i32
    %2 = arith.cmpi ne, %1, %c0_i32_0 : i32
    scf.if %2 {
      %c0_81 = arith.constant 0 : index
      %c0_82 = arith.constant 0 : index
      %c0_83 = arith.constant 0 : index
      %201 = vector.load %arg2[%c0_81, %c0_82, %c0_83] : memref<1x8x32xbf16, #tpu.memory_space<vmem>>, vector<1x8x32xbf16>
      %202 = arith.extf %201 : vector<1x8x32xbf16> to vector<1x8x32xf32>
      %203 = vector.shape_cast %202 : vector<1x8x32xf32> to vector<8x32xf32>
      %c0_84 = arith.constant 0 : index
      %c0_85 = arith.constant 0 : index
      %204 = vector.load %arg19[%c0_84, %c0_85] : memref<8x32xf32, #tpu.memory_space<vmem>>, vector<8x32xf32>
      tpu.vector_store %arg19[%c0_84, %c0_85], %203 {strides = array<i32>} : memref<8x32xf32, #tpu.memory_space<vmem>>, vector<8x32xf32>,
    } else {
    }
    %c0 = arith.constant 0 : index
    %c0_1 = arith.constant 0 : index
    %3 = vector.load %arg19[%c0, %c0_1] : memref<8x32xf32, #tpu.memory_space<vmem>>, vector<8x32xf32>
    %4 = arith.truncf %3 : vector<8x32xf32> to vector<8x32xbf16>
    %c0_2 = arith.constant 0 : index
    %c0_3 = arith.constant 0 : index
    %c0_4 = arith.constant 0 : index
    %5 = vector.load %arg4[%c0_2, %c0_3, %c0_4] : memref<1x32x96xbf16, #tpu.memory_space<vmem>>, vector<1x32x96xbf16>
    %6 = vector.shape_cast %5 : vector<1x32x96xbf16> to vector<32x96xbf16>
    %cst = arith.constant dense<0.000000e+00> : vector<8x96xf32>
    %7 = tpu.matmul %4, %6, %cst {dimension_numbers = #tpu.dot_dimension_numbers<[1], [0], [0], [1], [0, 0, 1, 1], [], []>} : vector<8x32xbf16>, vector<32x96xbf16>, vector<8x96xf32> -> vector<8x96xf32>
    %c0_5 = arith.constant 0 : index
    %c0_6 = arith.constant 0 : index
    %c0_7 = arith.constant 0 : index
    %8 = vector.load %arg5[%c0_5, %c0_6, %c0_7] : memref<1x1x96xf32, #tpu.memory_space<vmem>>, vector<1x1x96xf32>
    %9 = vector.shape_cast %8 : vector<1x1x96xf32> to vector<1x96xf32>
    %10 = vector.broadcast %9 : vector<1x96xf32> to vector<8x96xf32>
    %11 = arith.addf %7, %10 : vector<8x96xf32>
    %12 = arith.truncf %11 : vector<8x96xf32> to vector<8x96xbf16>
    %13 = vector.shape_cast %12 : vector<8x96xbf16> to vector<1x8x96xbf16>
    %c0_8 = arith.constant 0 : index
    %c0_9 = arith.constant 0 : index
    %c0_10 = arith.constant 0 : index
    %14 = vector.load %arg3[%c0_8, %c0_9, %c0_10] : memref<1x1x8xf32, #tpu.memory_space<vmem>>, vector<1x1x8xf32>
    %c0_11 = arith.constant 0 : index
    %c0_12 = arith.constant 0 : index
    %c0_13 = arith.constant 0 : index
    %15 = vector.load %arg6[%c0_11, %c0_12, %c0_13] : memref<1x32x32xbf16, #tpu.memory_space<vmem>>, vector<1x32x32xbf16>
    %16 = vector.shape_cast %15 : vector<1x32x32xbf16> to vector<32x32xbf16>
    %cst_14 = arith.constant 0.000000e+00 : f32
    %17 = vector.broadcast %cst_14 : f32 to vector<8x32xf32>
    %18 = vector.extract_strided_slice %13 {offsets = [0, 0, 0], sizes = [1, 8, 8], strides = [1, 1, 1]} : vector<1x8x96xbf16> to vector<1x8x8xbf16>
    %19 = vector.extract_strided_slice %13 {offsets = [0, 0, 32], sizes = [1, 8, 8], strides = [1, 1, 1]} : vector<1x8x96xbf16> to vector<1x8x8xbf16>
    %20 = vector.extract_strided_slice %13 {offsets = [0, 0, 64], sizes = [1, 8, 8], strides = [1, 1, 1]} : vector<1x8x96xbf16> to vector<1x8x8xbf16>
    "tpu.trace_start"() <{level = 10 : i32, message = "bqd,bkd->bqk"}> : () -> ()
    %cst_15 = arith.constant dense<0.000000e+00> : vector<1x8x8xf32>
    %21 = tpu.matmul %18, %19, %cst_15 {dimension_numbers = #tpu.dot_dimension_numbers<[2], [2], [1], [1], [0, 0, 0, 1, 1, 1], [0], [0]>} : vector<1x8x8xbf16>, vector<1x8x8xbf16>, vector<1x8x8xf32> -> vector<1x8x8xf32>
    "tpu.trace_stop"() : () -> ()
    %22 = vector.broadcast %14 : vector<1x1x8xf32> to vector<1x8x8xf32>
    %23 = arith.addf %21, %22 : vector<1x8x8xf32>
    %cst_16 = arith.constant dense<0xFF800000> : vector<1x8xf32>
    %24 = vector.multi_reduction <maximumf>, %23, %cst_16 [2] : vector<1x8x8xf32> to vector<1x8xf32>
    %25 = vector.shape_cast %24 : vector<1x8xf32> to vector<1x8x1xf32>
    %26 = vector.broadcast %25 : vector<1x8x1xf32> to vector<1x8x8xf32>
    %27 = arith.subf %23, %26 : vector<1x8x8xf32>
    %28 = math.exp %27 : vector<1x8x8xf32>
    %cst_17 = arith.constant dense<0.000000e+00> : vector<1x8xf32>
    %29 = vector.multi_reduction <add>, %28, %cst_17 [2] : vector<1x8x8xf32> to vector<1x8xf32>
    %30 = vector.shape_cast %29 : vector<1x8xf32> to vector<1x8x1xf32>
    %31 = tpu.reciprocal %30 {approx = true} : vector<1x8x1xf32> -> vector<1x8x1xf32>
    %32 = vector.broadcast %31 : vector<1x8x1xf32> to vector<1x8x8xf32>
    %33 = arith.mulf %28, %32 : vector<1x8x8xf32>
    %34 = arith.truncf %33 : vector<1x8x8xf32> to vector<1x8x8xbf16>
    "tpu.trace_start"() <{level = 10 : i32, message = "bqk,bkd->bqd"}> : () -> ()
    %cst_18 = arith.constant dense<0.000000e+00> : vector<1x8x8xf32>
    %35 = tpu.matmul %34, %20, %cst_18 {dimension_numbers = #tpu.dot_dimension_numbers<[2], [1], [1], [2], [0, 0, 0, 1, 1, 2], [0], [0]>} : vector<1x8x8xbf16>, vector<1x8x8xbf16>, vector<1x8x8xf32> -> vector<1x8x8xf32>
    "tpu.trace_stop"() : () -> ()
    %36 = vector.shape_cast %35 : vector<1x8x8xf32> to vector<8x8xf32>
    %37 = arith.truncf %36 : vector<8x8xf32> to vector<8x8xbf16>
    %38 = vector.extract_strided_slice %16 {offsets = [0, 0], sizes = [8, 32], strides = [1, 1]} : vector<32x32xbf16> to vector<8x32xbf16>
    %cst_19 = arith.constant dense<0.000000e+00> : vector<8x32xf32>
    %39 = tpu.matmul %37, %38, %cst_19 {dimension_numbers = #tpu.dot_dimension_numbers<[1], [0], [0], [1], [0, 0, 1, 1], [], []>} : vector<8x8xbf16>, vector<8x32xbf16>, vector<8x32xf32> -> vector<8x32xf32>
    %40 = arith.addf %17, %39 : vector<8x32xf32>
    %41 = vector.extract_strided_slice %13 {offsets = [0, 0, 8], sizes = [1, 8, 8], strides = [1, 1, 1]} : vector<1x8x96xbf16> to vector<1x8x8xbf16>
    %42 = vector.extract_strided_slice %13 {offsets = [0, 0, 40], sizes = [1, 8, 8], strides = [1, 1, 1]} : vector<1x8x96xbf16> to vector<1x8x8xbf16>
    %43 = vector.extract_strided_slice %13 {offsets = [0, 0, 72], sizes = [1, 8, 8], strides = [1, 1, 1]} : vector<1x8x96xbf16> to vector<1x8x8xbf16>
    "tpu.trace_start"() <{level = 10 : i32, message = "bqd,bkd->bqk"}> : () -> ()
    %cst_20 = arith.constant dense<0.000000e+00> : vector<1x8x8xf32>
    %44 = tpu.matmul %41, %42, %cst_20 {dimension_numbers = #tpu.dot_dimension_numbers<[2], [2], [1], [1], [0, 0, 0, 1, 1, 1], [0], [0]>} : vector<1x8x8xbf16>, vector<1x8x8xbf16>, vector<1x8x8xf32> -> vector<1x8x8xf32>
    "tpu.trace_stop"() : () -> ()
    %45 = vector.broadcast %14 : vector<1x1x8xf32> to vector<1x8x8xf32>
    %46 = arith.addf %44, %45 : vector<1x8x8xf32>
    %cst_21 = arith.constant dense<0xFF800000> : vector<1x8xf32>
    %47 = vector.multi_reduction <maximumf>, %46, %cst_21 [2] : vector<1x8x8xf32> to vector<1x8xf32>
    %48 = vector.shape_cast %47 : vector<1x8xf32> to vector<1x8x1xf32>
    %49 = vector.broadcast %48 : vector<1x8x1xf32> to vector<1x8x8xf32>
    %50 = arith.subf %46, %49 : vector<1x8x8xf32>
    %51 = math.exp %50 : vector<1x8x8xf32>
    %cst_22 = arith.constant dense<0.000000e+00> : vector<1x8xf32>
    %52 = vector.multi_reduction <add>, %51, %cst_22 [2] : vector<1x8x8xf32> to vector<1x8xf32>
    %53 = vector.shape_cast %52 : vector<1x8xf32> to vector<1x8x1xf32>
    %54 = tpu.reciprocal %53 {approx = true} : vector<1x8x1xf32> -> vector<1x8x1xf32>
    %55 = vector.broadcast %54 : vector<1x8x1xf32> to vector<1x8x8xf32>
    %56 = arith.mulf %51, %55 : vector<1x8x8xf32>
    %57 = arith.truncf %56 : vector<1x8x8xf32> to vector<1x8x8xbf16>
    "tpu.trace_start"() <{level = 10 : i32, message = "bqk,bkd->bqd"}> : () -> ()
    %cst_23 = arith.constant dense<0.000000e+00> : vector<1x8x8xf32>
    %58 = tpu.matmul %57, %43, %cst_23 {dimension_numbers = #tpu.dot_dimension_numbers<[2], [1], [1], [2], [0, 0, 0, 1, 1, 2], [0], [0]>} : vector<1x8x8xbf16>, vector<1x8x8xbf16>, vector<1x8x8xf32> -> vector<1x8x8xf32>
    "tpu.trace_stop"() : () -> ()
    %59 = vector.shape_cast %58 : vector<1x8x8xf32> to vector<8x8xf32>
    %60 = arith.truncf %59 : vector<8x8xf32> to vector<8x8xbf16>
    %61 = vector.extract_strided_slice %16 {offsets = [8, 0], sizes = [8, 32], strides = [1, 1]} : vector<32x32xbf16> to vector<8x32xbf16>
    %cst_24 = arith.constant dense<0.000000e+00> : vector<8x32xf32>
    %62 = tpu.matmul %60, %61, %cst_24 {dimension_numbers = #tpu.dot_dimension_numbers<[1], [0], [0], [1], [0, 0, 1, 1], [], []>} : vector<8x8xbf16>, vector<8x32xbf16>, vector<8x32xf32> -> vector<8x32xf32>
    %63 = arith.addf %40, %62 : vector<8x32xf32>
    %64 = vector.extract_strided_slice %13 {offsets = [0, 0, 16], sizes = [1, 8, 8], strides = [1, 1, 1]} : vector<1x8x96xbf16> to vector<1x8x8xbf16>
    %65 = vector.extract_strided_slice %13 {offsets = [0, 0, 48], sizes = [1, 8, 8], strides = [1, 1, 1]} : vector<1x8x96xbf16> to vector<1x8x8xbf16>
    %66 = vector.extract_strided_slice %13 {offsets = [0, 0, 80], sizes = [1, 8, 8], strides = [1, 1, 1]} : vector<1x8x96xbf16> to vector<1x8x8xbf16>
    "tpu.trace_start"() <{level = 10 : i32, message = "bqd,bkd->bqk"}> : () -> ()
    %cst_25 = arith.constant dense<0.000000e+00> : vector<1x8x8xf32>
    %67 = tpu.matmul %64, %65, %cst_25 {dimension_numbers = #tpu.dot_dimension_numbers<[2], [2], [1], [1], [0, 0, 0, 1, 1, 1], [0], [0]>} : vector<1x8x8xbf16>, vector<1x8x8xbf16>, vector<1x8x8xf32> -> vector<1x8x8xf32>
    "tpu.trace_stop"() : () -> ()
    %68 = vector.broadcast %14 : vector<1x1x8xf32> to vector<1x8x8xf32>
    %69 = arith.addf %67, %68 : vector<1x8x8xf32>
    %cst_26 = arith.constant dense<0xFF800000> : vector<1x8xf32>
    %70 = vector.multi_reduction <maximumf>, %69, %cst_26 [2] : vector<1x8x8xf32> to vector<1x8xf32>
    %71 = vector.shape_cast %70 : vector<1x8xf32> to vector<1x8x1xf32>
    %72 = vector.broadcast %71 : vector<1x8x1xf32> to vector<1x8x8xf32>
    %73 = arith.subf %69, %72 : vector<1x8x8xf32>
    %74 = math.exp %73 : vector<1x8x8xf32>
    %cst_27 = arith.constant dense<0.000000e+00> : vector<1x8xf32>
    %75 = vector.multi_reduction <add>, %74, %cst_27 [2] : vector<1x8x8xf32> to vector<1x8xf32>
    %76 = vector.shape_cast %75 : vector<1x8xf32> to vector<1x8x1xf32>
    %77 = tpu.reciprocal %76 {approx = true} : vector<1x8x1xf32> -> vector<1x8x1xf32>
    %78 = vector.broadcast %77 : vector<1x8x1xf32> to vector<1x8x8xf32>
    %79 = arith.mulf %74, %78 : vector<1x8x8xf32>
    %80 = arith.truncf %79 : vector<1x8x8xf32> to vector<1x8x8xbf16>
    "tpu.trace_start"() <{level = 10 : i32, message = "bqk,bkd->bqd"}> : () -> ()
    %cst_28 = arith.constant dense<0.000000e+00> : vector<1x8x8xf32>
    %81 = tpu.matmul %80, %66, %cst_28 {dimension_numbers = #tpu.dot_dimension_numbers<[2], [1], [1], [2], [0, 0, 0, 1, 1, 2], [0], [0]>} : vector<1x8x8xbf16>, vector<1x8x8xbf16>, vector<1x8x8xf32> -> vector<1x8x8xf32>
    "tpu.trace_stop"() : () -> ()
    %82 = vector.shape_cast %81 : vector<1x8x8xf32> to vector<8x8xf32>
    %83 = arith.truncf %82 : vector<8x8xf32> to vector<8x8xbf16>
    %84 = vector.extract_strided_slice %16 {offsets = [16, 0], sizes = [8, 32], strides = [1, 1]} : vector<32x32xbf16> to vector<8x32xbf16>
    %cst_29 = arith.constant dense<0.000000e+00> : vector<8x32xf32>
    %85 = tpu.matmul %83, %84, %cst_29 {dimension_numbers = #tpu.dot_dimension_numbers<[1], [0], [0], [1], [0, 0, 1, 1], [], []>} : vector<8x8xbf16>, vector<8x32xbf16>, vector<8x32xf32> -> vector<8x32xf32>
    %86 = arith.addf %63, %85 : vector<8x32xf32>
    %87 = vector.extract_strided_slice %13 {offsets = [0, 0, 24], sizes = [1, 8, 8], strides = [1, 1, 1]} : vector<1x8x96xbf16> to vector<1x8x8xbf16>
    %88 = vector.extract_strided_slice %13 {offsets = [0, 0, 56], sizes = [1, 8, 8], strides = [1, 1, 1]} : vector<1x8x96xbf16> to vector<1x8x8xbf16>
    %89 = vector.extract_strided_slice %13 {offsets = [0, 0, 88], sizes = [1, 8, 8], strides = [1, 1, 1]} : vector<1x8x96xbf16> to vector<1x8x8xbf16>
    "tpu.trace_start"() <{level = 10 : i32, message = "bqd,bkd->bqk"}> : () -> ()
    %cst_30 = arith.constant dense<0.000000e+00> : vector<1x8x8xf32>
    %90 = tpu.matmul %87, %88, %cst_30 {dimension_numbers = #tpu.dot_dimension_numbers<[2], [2], [1], [1], [0, 0, 0, 1, 1, 1], [0], [0]>} : vector<1x8x8xbf16>, vector<1x8x8xbf16>, vector<1x8x8xf32> -> vector<1x8x8xf32>
    "tpu.trace_stop"() : () -> ()
    %91 = vector.broadcast %14 : vector<1x1x8xf32> to vector<1x8x8xf32>
    %92 = arith.addf %90, %91 : vector<1x8x8xf32>
    %cst_31 = arith.constant dense<0xFF800000> : vector<1x8xf32>
    %93 = vector.multi_reduction <maximumf>, %92, %cst_31 [2] : vector<1x8x8xf32> to vector<1x8xf32>
    %94 = vector.shape_cast %93 : vector<1x8xf32> to vector<1x8x1xf32>
    %95 = vector.broadcast %94 : vector<1x8x1xf32> to vector<1x8x8xf32>
    %96 = arith.subf %92, %95 : vector<1x8x8xf32>
    %97 = math.exp %96 : vector<1x8x8xf32>
    %cst_32 = arith.constant dense<0.000000e+00> : vector<1x8xf32>
    %98 = vector.multi_reduction <add>, %97, %cst_32 [2] : vector<1x8x8xf32> to vector<1x8xf32>
    %99 = vector.shape_cast %98 : vector<1x8xf32> to vector<1x8x1xf32>
    %100 = tpu.reciprocal %99 {approx = true} : vector<1x8x1xf32> -> vector<1x8x1xf32>
    %101 = vector.broadcast %100 : vector<1x8x1xf32> to vector<1x8x8xf32>
    %102 = arith.mulf %97, %101 : vector<1x8x8xf32>
    %103 = arith.truncf %102 : vector<1x8x8xf32> to vector<1x8x8xbf16>
    "tpu.trace_start"() <{level = 10 : i32, message = "bqk,bkd->bqd"}> : () -> ()
    %cst_33 = arith.constant dense<0.000000e+00> : vector<1x8x8xf32>
    %104 = tpu.matmul %103, %89, %cst_33 {dimension_numbers = #tpu.dot_dimension_numbers<[2], [1], [1], [2], [0, 0, 0, 1, 1, 2], [0], [0]>} : vector<1x8x8xbf16>, vector<1x8x8xbf16>, vector<1x8x8xf32> -> vector<1x8x8xf32>
    "tpu.trace_stop"() : () -> ()
    %105 = vector.shape_cast %104 : vector<1x8x8xf32> to vector<8x8xf32>
    %106 = arith.truncf %105 : vector<8x8xf32> to vector<8x8xbf16>
    %107 = vector.extract_strided_slice %16 {offsets = [24, 0], sizes = [8, 32], strides = [1, 1]} : vector<32x32xbf16> to vector<8x32xbf16>
    %cst_34 = arith.constant dense<0.000000e+00> : vector<8x32xf32>
    %108 = tpu.matmul %106, %107, %cst_34 {dimension_numbers = #tpu.dot_dimension_numbers<[1], [0], [0], [1], [0, 0, 1, 1], [], []>} : vector<8x8xbf16>, vector<8x32xbf16>, vector<8x32xf32> -> vector<8x32xf32>
    %109 = arith.addf %86, %108 : vector<8x32xf32>
    %110 = arith.addf %3, %109 : vector<8x32xf32>
    %c0_35 = arith.constant 0 : index
    %c0_36 = arith.constant 0 : index
    %c0_37 = arith.constant 0 : index
    %111 = vector.load %arg7[%c0_35, %c0_36, %c0_37] : memref<1x1x32xf32, #tpu.memory_space<vmem>>, vector<1x1x32xf32>
    %112 = vector.shape_cast %111 : vector<1x1x32xf32> to vector<1x32xf32>
    %113 = vector.broadcast %112 : vector<1x32xf32> to vector<8x32xf32>
    %114 = arith.addf %110, %113 : vector<8x32xf32>
    %c0_38 = arith.constant 0 : index
    %c0_39 = arith.constant 0 : index
    %c0_40 = arith.constant 0 : index
    %115 = vector.load %arg8[%c0_38, %c0_39, %c0_40] : memref<1x1x32xf32, #tpu.memory_space<vmem>>, vector<1x1x32xf32>
    %116 = vector.shape_cast %115 : vector<1x1x32xf32> to vector<1x32xf32>
    %c0_41 = arith.constant 0 : index
    %c0_42 = arith.constant 0 : index
    %c0_43 = arith.constant 0 : index
    %117 = vector.load %arg9[%c0_41, %c0_42, %c0_43] : memref<1x1x32xf32, #tpu.memory_space<vmem>>, vector<1x1x32xf32>
    %118 = vector.shape_cast %117 : vector<1x1x32xf32> to vector<1x32xf32>
    %cst_44 = arith.constant dense<0.000000e+00> : vector<8xf32>
    %119 = vector.multi_reduction <add>, %114, %cst_44 [1] : vector<8x32xf32> to vector<8xf32>
    %120 = vector.shape_cast %119 : vector<8xf32> to vector<8x1xf32>
    %cst_45 = arith.constant 3.200000e+01 : f32
    %121 = vector.broadcast %cst_45 : f32 to vector<8x1xf32>
    %122 = arith.divf %120, %121 : vector<8x1xf32>
    %123 = vector.broadcast %122 : vector<8x1xf32> to vector<8x32xf32>
    %124 = arith.subf %114, %123 : vector<8x32xf32>
    %125 = arith.mulf %124, %124 : vector<8x32xf32>
    %cst_46 = arith.constant dense<0.000000e+00> : vector<8xf32>
    %126 = vector.multi_reduction <add>, %125, %cst_46 [1] : vector<8x32xf32> to vector<8xf32>
    %127 = vector.shape_cast %126 : vector<8xf32> to vector<8x1xf32>
    %cst_47 = arith.constant 3.200000e+01 : f32
    %128 = vector.broadcast %cst_47 : f32 to vector<8x1xf32>
    %129 = arith.divf %127, %128 : vector<8x1xf32>
    %130 = vector.broadcast %122 : vector<8x1xf32> to vector<8x32xf32>
    %131 = arith.subf %114, %130 : vector<8x32xf32>
    %cst_48 = arith.constant 9.99999996E-13 : f32
    %132 = vector.broadcast %cst_48 : f32 to vector<8x1xf32>
    %133 = arith.addf %129, %132 : vector<8x1xf32>
    %134 = math.rsqrt %133 : vector<8x1xf32>
    %135 = vector.broadcast %134 : vector<8x1xf32> to vector<8x32xf32>
    %136 = arith.mulf %131, %135 : vector<8x32xf32>
    %137 = vector.broadcast %116 : vector<1x32xf32> to vector<8x32xf32>
    %138 = arith.mulf %136, %137 : vector<8x32xf32>
    %139 = vector.broadcast %118 : vector<1x32xf32> to vector<8x32xf32>
    %140 = arith.addf %138, %139 : vector<8x32xf32>
    %141 = arith.truncf %140 : vector<8x32xf32> to vector<8x32xbf16>
    %c0_49 = arith.constant 0 : index
    %c0_50 = arith.constant 0 : index
    %c0_51 = arith.constant 0 : index
    %142 = vector.load %arg10[%c0_49, %c0_50, %c0_51] : memref<1x32x64xbf16, #tpu.memory_space<vmem>>, vector<1x32x64xbf16>
    %143 = vector.shape_cast %142 : vector<1x32x64xbf16> to vector<32x64xbf16>
    %cst_52 = arith.constant dense<0.000000e+00> : vector<8x64xf32>
    %144 = tpu.matmul %141, %143, %cst_52 {dimension_numbers = #tpu.dot_dimension_numbers<[1], [0], [0], [1], [0, 0, 1, 1], [], []>} : vector<8x32xbf16>, vector<32x64xbf16>, vector<8x64xf32> -> vector<8x64xf32>
    %c0_53 = arith.constant 0 : index
    %c0_54 = arith.constant 0 : index
    %c0_55 = arith.constant 0 : index
    %145 = vector.load %arg11[%c0_53, %c0_54, %c0_55] : memref<1x1x64xf32, #tpu.memory_space<vmem>>, vector<1x1x64xf32>
    %146 = vector.shape_cast %145 : vector<1x1x64xf32> to vector<1x64xf32>
    %147 = vector.broadcast %146 : vector<1x64xf32> to vector<8x64xf32>
    %148 = arith.addf %144, %147 : vector<8x64xf32>
    %149 = arith.mulf %148, %148 : vector<8x64xf32>
    %150 = arith.mulf %148, %149 : vector<8x64xf32>
    %cst_56 = arith.constant 4.471500e-02 : f32
    %151 = vector.broadcast %cst_56 : f32 to vector<8x64xf32>
    %152 = arith.mulf %151, %150 : vector<8x64xf32>
    %153 = arith.addf %148, %152 : vector<8x64xf32>
    %cst_57 = arith.constant 0.797884583 : f32
    %154 = vector.broadcast %cst_57 : f32 to vector<8x64xf32>
    %155 = arith.mulf %154, %153 : vector<8x64xf32>
    %156 = math.tanh %155 : vector<8x64xf32>
    %cst_58 = arith.constant 1.000000e+00 : f32
    %157 = vector.broadcast %cst_58 : f32 to vector<8x64xf32>
    %158 = arith.addf %157, %156 : vector<8x64xf32>
    %cst_59 = arith.constant 5.000000e-01 : f32
    %159 = vector.broadcast %cst_59 : f32 to vector<8x64xf32>
    %160 = arith.mulf %159, %158 : vector<8x64xf32>
    %161 = arith.mulf %148, %160 : vector<8x64xf32>
    %162 = arith.truncf %161 : vector<8x64xf32> to vector<8x64xbf16>
    %c0_60 = arith.constant 0 : index
    %c0_61 = arith.constant 0 : index
    %c0_62 = arith.constant 0 : index
    %163 = vector.load %arg12[%c0_60, %c0_61, %c0_62] : memref<1x64x32xbf16, #tpu.memory_space<vmem>>, vector<1x64x32xbf16>
    %164 = vector.shape_cast %163 : vector<1x64x32xbf16> to vector<64x32xbf16>
    %cst_63 = arith.constant dense<0.000000e+00> : vector<8x32xf32>
    %165 = tpu.matmul %162, %164, %cst_63 {dimension_numbers = #tpu.dot_dimension_numbers<[1], [0], [0], [1], [0, 0, 1, 1], [], []>} : vector<8x64xbf16>, vector<64x32xbf16>, vector<8x32xf32> -> vector<8x32xf32>
    %c0_64 = arith.constant 0 : index
    %c0_65 = arith.constant 0 : index
    %c0_66 = arith.constant 0 : index
    %166 = vector.load %arg13[%c0_64, %c0_65, %c0_66] : memref<1x1x32xf32, #tpu.memory_space<vmem>>, vector<1x1x32xf32>
    %167 = vector.shape_cast %166 : vector<1x1x32xf32> to vector<1x32xf32>
    %168 = vector.broadcast %167 : vector<1x32xf32> to vector<8x32xf32>
    %169 = arith.addf %165, %168 : vector<8x32xf32>
    %170 = arith.addf %140, %169 : vector<8x32xf32>
    %c0_67 = arith.constant 0 : index
    %c0_68 = arith.constant 0 : index
    %c0_69 = arith.constant 0 : index
    %171 = vector.load %arg14[%c0_67, %c0_68, %c0_69] : memref<1x1x32xf32, #tpu.memory_space<vmem>>, vector<1x1x32xf32>
    %172 = vector.shape_cast %171 : vector<1x1x32xf32> to vector<1x32xf32>
    %c0_70 = arith.constant 0 : index
    %c0_71 = arith.constant 0 : index
    %c0_72 = arith.constant 0 : index
    %173 = vector.load %arg15[%c0_70, %c0_71, %c0_72] : memref<1x1x32xf32, #tpu.memory_space<vmem>>, vector<1x1x32xf32>
    %174 = vector.shape_cast %173 : vector<1x1x32xf32> to vector<1x32xf32>
    %cst_73 = arith.constant dense<0.000000e+00> : vector<8xf32>
    %175 = vector.multi_reduction <add>, %170, %cst_73 [1] : vector<8x32xf32> to vector<8xf32>
    %176 = vector.shape_cast %175 : vector<8xf32> to vector<8x1xf32>
    %cst_74 = arith.constant 3.200000e+01 : f32
    %177 = vector.broadcast %cst_74 : f32 to vector<8x1xf32>
    %178 = arith.divf %176, %177 : vector<8x1xf32>
    %179 = vector.broadcast %178 : vector<8x1xf32> to vector<8x32xf32>
    %180 = arith.subf %170, %179 : vector<8x32xf32>
    %181 = arith.mulf %180, %180 : vector<8x32xf32>
    %cst_75 = arith.constant dense<0.000000e+00> : vector<8xf32>
    %182 = vector.multi_reduction <add>, %181, %cst_75 [1] : vector<8x32xf32> to vector<8xf32>
    %183 = vector.shape_cast %182 : vector<8xf32> to vector<8x1xf32>
    %cst_76 = arith.constant 3.200000e+01 : f32
    %184 = vector.broadcast %cst_76 : f32 to vector<8x1xf32>
    %185 = arith.divf %183, %184 : vector<8x1xf32>
    %186 = vector.broadcast %178 : vector<8x1xf32> to vector<8x32xf32>
    %187 = arith.subf %170, %186 : vector<8x32xf32>
    %cst_77 = arith.constant 9.99999996E-13 : f32
    %188 = vector.broadcast %cst_77 : f32 to vector<8x1xf32>
    %189 = arith.addf %185, %188 : vector<8x1xf32>
    %190 = math.rsqrt %189 : vector<8x1xf32>
    %191 = vector.broadcast %190 : vector<8x1xf32> to vector<8x32xf32>
    %192 = arith.mulf %187, %191 : vector<8x32xf32>
    %193 = vector.broadcast %172 : vector<1x32xf32> to vector<8x32xf32>
    %194 = arith.mulf %192, %193 : vector<8x32xf32>
    %195 = vector.broadcast %174 : vector<1x32xf32> to vector<8x32xf32>
    %196 = arith.addf %194, %195 : vector<8x32xf32>
    %c0_78 = arith.constant 0 : index
    %c0_79 = arith.constant 0 : index
    %197 = vector.load %arg19[%c0_78, %c0_79] : memref<8x32xf32, #tpu.memory_space<vmem>>, vector<8x32xf32>
    tpu.vector_store %arg19[%c0_78, %c0_79], %196 {strides = array<i32>} : memref<8x32xf32, #tpu.memory_space<vmem>>, vector<8x32xf32>,
    %c1_i32 = arith.constant 1 : i32
    %198 = arith.cmpi eq, %arg1, %c1_i32 : i32
    %199 = arith.extui %198 : i1 to i32
    %c0_i32_80 = arith.constant 0 : i32
    %200 = arith.cmpi ne, %199, %c0_i32_80 : i32
    scf.if %200 {
      %c0_81 = arith.constant 0 : index
      %c0_82 = arith.constant 0 : index
      %201 = vector.load %arg19[%c0_81, %c0_82] : memref<8x32xf32, #tpu.memory_space<vmem>>, vector<8x32xf32>
      %202 = vector.shape_cast %201 : vector<8x32xf32> to vector<1x8x32xf32>
      %203 = vector.extract_strided_slice %202 {offsets = [0, 0, 0], sizes = [1, 1, 32], strides = [1, 1, 1]} : vector<1x8x32xf32> to vector<1x1x32xf32>
      %204 = vector.shape_cast %203 : vector<1x1x32xf32> to vector<1x32xf32>
      %c0_83 = arith.constant 0 : index
      %c0_84 = arith.constant 0 : index
      %205 = vector.load %arg16[%c0_83, %c0_84] : memref<1x32xf32, #tpu.memory_space<vmem>>, vector<1x32xf32>
      %206 = arith.mulf %204, %205 : vector<1x32xf32>
      %cst_85 = arith.constant dense<0.000000e+00> : vector<1xf32>
      %207 = vector.multi_reduction <add>, %206, %cst_85 [1] : vector<1x32xf32> to vector<1xf32>
      %208 = vector.shape_cast %207 : vector<1xf32> to vector<1x1xf32>
      %c0_86 = arith.constant 0 : index
      %c0_87 = arith.constant 0 : index
      %209 = memref.load %arg17[%c0_86, %c0_87] : memref<1x1xf32, #tpu.memory_space<smem>>
      %210 = vector.broadcast %209 : f32 to vector<1x1xf32>
      %211 = arith.addf %208, %210 : vector<1x1xf32>
      %212 = vector.shape_cast %211 : vector<1x1xf32> to vector<1x1x1xf32>
      %213 = vector.shape_cast %212 : vector<1x1x1xf32> to vector<1x1x1xf32>
      %214 = vector.broadcast %213 : vector<1x1x1xf32> to vector<1x1x128xf32>
      %c0_88 = arith.constant 0 : index
      %c0_89 = arith.constant 0 : index
      %c0_90 = arith.constant 0 : index
      %215 = vector.load %arg18[%c0_88, %c0_89, %c0_90] : memref<1x1x128xf32, #tpu.memory_space<vmem>>, vector<1x1x128xf32>
      tpu.vector_store %arg18[%c0_88, %c0_89, %c0_90], %214 {strides = array<i32>} : memref<1x1x128xf32, #tpu.memory_space<vmem>>, vector<1x1x128xf32>,
    } else {
    }
    return
  }
  func.func @transform_0(%arg0: i32, %arg1: i32) -> (i32, i32, i32) {
    %c0_i32 = arith.constant 0 : i32
    %c0_i32_0 = arith.constant 0 : i32
    %c0_i32_1 = arith.constant 0 : i32
    return %arg0, %c0_i32, %c0_i32_0 : i32, i32, i32
  }
  func.func @transform_1(%arg0: i32, %arg1: i32) -> (i32, i32, i32) {
    %c0_i32 = arith.constant 0 : i32
    %c0_i32_0 = arith.constant 0 : i32
    %c0_i32_1 = arith.constant 0 : i32
    return %arg0, %c0_i32, %c0_i32_0 : i32, i32, i32
  }
  func.func @transform_2(%arg0: i32, %arg1: i32) -> (i32, i32, i32) {
    %c0_i32 = arith.constant 0 : i32
    %c0_i32_0 = arith.constant 0 : i32
    %c0_i32_1 = arith.constant 0 : i32
    return %arg1, %c0_i32, %c0_i32_0 : i32, i32, i32
  }
  func.func @transform_3(%arg0: i32, %arg1: i32) -> (i32, i32, i32) {
    %c0_i32 = arith.constant 0 : i32
    %c0_i32_0 = arith.constant 0 : i32
    %c0_i32_1 = arith.constant 0 : i32
    return %arg1, %c0_i32, %c0_i32_0 : i32, i32, i32
  }
  func.func @transform_4(%arg0: i32, %arg1: i32) -> (i32, i32, i32) {
    %c0_i32 = arith.constant 0 : i32
    %c0_i32_0 = arith.constant 0 : i32
    %c0_i32_1 = arith.constant 0 : i32
    return %arg1, %c0_i32, %c0_i32_0 : i32, i32, i32
  }
  func.func @transform_5(%arg0: i32, %arg1: i32) -> (i32, i32, i32) {
    %c0_i32 = arith.constant 0 : i32
    %c0_i32_0 = arith.constant 0 : i32
    %c0_i32_1 = arith.constant 0 : i32
    return %arg1, %c0_i32, %c0_i32_0 : i32, i32, i32
  }
  func.func @transform_6(%arg0: i32, %arg1: i32) -> (i32, i32, i32) {
    %c0_i32 = arith.constant 0 : i32
    %c0_i32_0 = arith.constant 0 : i32
    %c0_i32_1 = arith.constant 0 : i32
    return %arg1, %c0_i32, %c0_i32_0 : i32, i32, i32
  }
  func.func @transform_7(%arg0: i32, %arg1: i32) -> (i32, i32, i32) {
    %c0_i32 = arith.constant 0 : i32
    %c0_i32_0 = arith.constant 0 : i32
    %c0_i32_1 = arith.constant 0 : i32
    return %arg1, %c0_i32, %c0_i32_0 : i32, i32, i32
  }
  func.func @transform_8(%arg0: i32, %arg1: i32) -> (i32, i32, i32) {
    %c0_i32 = arith.constant 0 : i32
    %c0_i32_0 = arith.constant 0 : i32
    %c0_i32_1 = arith.constant 0 : i32
    return %arg1, %c0_i32, %c0_i32_0 : i32, i32, i32
  }
  func.func @transform_9(%arg0: i32, %arg1: i32) -> (i32, i32, i32) {
    %c0_i32 = arith.constant 0 : i32
    %c0_i32_0 = arith.constant 0 : i32
    %c0_i32_1 = arith.constant 0 : i32
    return %arg1, %c0_i32, %c0_i32_0 : i32, i32, i32
  }
  func.func @transform_10(%arg0: i32, %arg1: i32) -> (i32, i32, i32) {
    %c0_i32 = arith.constant 0 : i32
    %c0_i32_0 = arith.constant 0 : i32
    %c0_i32_1 = arith.constant 0 : i32
    return %arg1, %c0_i32, %c0_i32_0 : i32, i32, i32
  }
  func.func @transform_11(%arg0: i32, %arg1: i32) -> (i32, i32, i32) {
    %c0_i32 = arith.constant 0 : i32
    %c0_i32_0 = arith.constant 0 : i32
    %c0_i32_1 = arith.constant 0 : i32
    return %arg1, %c0_i32, %c0_i32_0 : i32, i32, i32
  }
  func.func @transform_12(%arg0: i32, %arg1: i32) -> (i32, i32, i32) {
    %c0_i32 = arith.constant 0 : i32
    %c0_i32_0 = arith.constant 0 : i32
    %c0_i32_1 = arith.constant 0 : i32
    return %arg1, %c0_i32, %c0_i32_0 : i32, i32, i32
  }
  func.func @transform_13(%arg0: i32, %arg1: i32) -> (i32, i32, i32) {
    %c0_i32 = arith.constant 0 : i32
    %c0_i32_0 = arith.constant 0 : i32
    %c0_i32_1 = arith.constant 0 : i32
    return %arg1, %c0_i32, %c0_i32_0 : i32, i32, i32
  }
  func.func @transform_14(%arg0: i32, %arg1: i32) -> (i32, i32) {
    %c0_i32 = arith.constant 0 : i32
    %c0_i32_0 = arith.constant 0 : i32
    %c0_i32_1 = arith.constant 0 : i32
    return %c0_i32, %c0_i32_0 : i32, i32
  }
  func.func @transform_15(%arg0: i32, %arg1: i32) -> (i32, i32) {
    %c0_i32 = arith.constant 0 : i32
    %c0_i32_0 = arith.constant 0 : i32
    %c0_i32_1 = arith.constant 0 : i32
    return %c0_i32, %c0_i32_0 : i32, i32
  }
  func.func @transform_16(%arg0: i32, %arg1: i32) -> (i32, i32, i32) {
    %c0_i32 = arith.constant 0 : i32
    %c0_i32_0 = arith.constant 0 : i32
    %c0_i32_1 = arith.constant 0 : i32
    return %arg0, %c0_i32, %c0_i32_0 : i32, i32, i32
  }
}

</mosaic_0001>

<llo_original>
// kernel: tpu_custom_call.1
$region0: #{tpu_custom_call.1}
  #allocation0 [shape = 'u32[]', space=smem, size = 0x4, offset = 0x4, fixed_abs, tag = 'smem constant byte address 0x4 - core index']
  #allocation1 [shape = 'u32[144,128]{1,0:T(1,128)}', space=vmem, size = 0x12000, scoped, tag = 'internal scratch']
  #allocation2 [shape = 'f32[8,32]{1,0:T(8,128)}', space=vmem, size = 0x1000, scoped, tag = 'scratch operand']
  #allocation3 [shape = 'f32[1,1]{1,0:T(1,128)S(6)}', space=smem, size = 0x200, scoped, tag = 'scoped memory for tpu_custom_call.1']
  %s0 = inlined_call_operand.hbm [shape: bf16[2,8,32], index: 0, kind: input, shape index: {}]
  %s1 = inlined_call_operand.vmem [shape: f32[2,1,8], index: 1, kind: input, shape index: {}]
  %s2 = inlined_call_operand.vmem [shape: bf16[2,32,96], index: 2, kind: input, shape index: {}]
  %s3 = inlined_call_operand.vmem [shape: f32[2,1,96], index: 3, kind: input, shape index: {}]
  %s4 = inlined_call_operand.vmem [shape: bf16[2,32,32], index: 4, kind: input, shape index: {}]
  %s5 = inlined_call_operand.vmem [shape: f32[2,1,32], index: 5, kind: input, shape index: {}]
  %s6 = inlined_call_operand.vmem [shape: f32[2,1,32], index: 6, kind: input, shape index: {}]
  %s7 = inlined_call_operand.vmem [shape: f32[2,1,32], index: 7, kind: input, shape index: {}]
  %s8 = inlined_call_operand.vmem [shape: bf16[2,32,64], index: 8, kind: input, shape index: {}]
  %s9 = inlined_call_operand.vmem [shape: f32[2,1,64], index: 9, kind: input, shape index: {}]
  %s10 = inlined_call_operand.vmem [shape: bf16[2,64,32], index: 10, kind: input, shape index: {}]
  %s11 = inlined_call_operand.vmem [shape: f32[2,1,32], index: 11, kind: input, shape index: {}]
  %s12 = inlined_call_operand.vmem [shape: f32[2,1,32], index: 12, kind: input, shape index: {}]
  %s13 = inlined_call_operand.vmem [shape: f32[2,1,32], index: 13, kind: input, shape index: {}]
  %s14 = inlined_call_operand.vmem [shape: f32[1,32], index: 14, kind: input, shape index: {}]
  %s15 = inlined_call_operand.<no memory space> [shape: f32[1,1], index: 15, kind: input, shape index: {}]
  %s16 = inlined_call_operand.hbm [shape: f32[2,1,128], index: 16, kind: output, shape index: {}]
  %s17 = sld [smem:[#allocation0]]
  $region109: #{tpu_custom_call.1} parent=0
    _
  %s19 = ssub.s32 1, %s17
  %s20 = scalar_select 0, %s19, %s17
  %21 = sst [smem:[#allocation3]] %s15
  $region1: #{tpu_custom_call.1} parent=0
    #allocation4 [shape = 'u8[4096]{0}', space=vmem, size = 0x1000, scoped, tag = 'input window, operand 0']
    #allocation5 [shape = 's32[2]{0}', space=sflag, size = 0x8, scoped, tag = 'scoped memory for tpu_custom_call.1']
    #allocation6 [shape = 's32[2]{0}', space=sflag, size = 0x8, scoped, tag = 'scoped memory for tpu_custom_call.1']
    #allocation7 [shape = 'u8[1024]{0}', space=vmem, size = 0x400, scoped, tag = 'output window, operand 0']
    %22 = vsyncpa [#allocation5], 0
    %s23 = scalar_lea.sflag [#allocation5], 1
    %24 = vsyncpa %s23, 0
    %25 = vsyncpa [#allocation6], 0
    %s26 = scalar_lea.sflag [#allocation6], 1
    %27 = vsyncpa %s26, 0
    loop: start=0, step=1, limit=6
    $region2: #{tpu_custom_call.1} parent=1 // loop_pre_header
      _
    $region3: #{tpu_custom_call.1} parent=1 // loop_header
      %s29 = sphi 0, %s33
      %p30 = scmp.ge.s32.totalorder %s29, 6
      %s36 = sphi 0, %s48
      %s37 = sphi 0, %s44
      %s38 = sphi 0, %s36
      %s39 = sphi 0, %s37
      %s40 = sphi 0, %s38
      %s41 = sphi 0, %s39
      %s51 = sphi 0, %s53
      %s54 = sphi 0, %s51
      %s55 = sphi 0, %s54
      %s71 = sphi 0, %s55
      %s77 = sphi 0, %s79
      %s80 = sphi 0, %s77
      %s81 = sphi 0, %s80
      %s97 = sphi 0, %s81
      %s103 = sphi 0, %s105
      %s106 = sphi 0, %s103
      %s107 = sphi 0, %s106
      %s123 = sphi 0, %s107
      %s129 = sphi 0, %s131
      %s132 = sphi 0, %s129
      %s133 = sphi 0, %s132
      %s149 = sphi 0, %s133
      %s155 = sphi 0, %s157
      %s158 = sphi 0, %s155
      %s159 = sphi 0, %s158
      %s175 = sphi 0, %s159
      %s181 = sphi 0, %s183
      %s184 = sphi 0, %s181
      %s185 = sphi 0, %s184
      %s201 = sphi 0, %s185
      %s207 = sphi 0, %s209
      %s210 = sphi 0, %s207
      %s211 = sphi 0, %s210
      %s227 = sphi 0, %s211
      %s233 = sphi 0, %s235
      %s236 = sphi 0, %s233
      %s237 = sphi 0, %s236
      %s253 = sphi 0, %s237
      %s259 = sphi 0, %s261
      %s262 = sphi 0, %s259
      %s263 = sphi 0, %s262
      %s279 = sphi 0, %s263
      %s285 = sphi 0, %s287
      %s288 = sphi 0, %s285
      %s289 = sphi 0, %s288
      %s305 = sphi 0, %s289
      %s311 = sphi 0, %s313
      %s314 = sphi 0, %s311
      %s315 = sphi 0, %s314
      %s331 = sphi 0, %s315
      %s337 = sphi 0, %s339
      %s340 = sphi 0, %s337
      %s341 = sphi 0, %s340
      %s357 = sphi 0, %s341
      %s363 = sphi 0, %s365
      %s366 = sphi 0, %s363
      %s367 = sphi 0, %s366
      %s383 = sphi 0, %s367
      %s389 = sphi 0, %s391
      %s392 = sphi 0, %s389
      %s393 = sphi 0, %s392
      %s409 = sphi 0, %s393
      %s413 = sphi 0, %s413
      %s415 = sphi 0, %s413
      %s416 = sphi 0, %s415
      %s430 = sphi 0, %s416
      %s434 = sphi 0, %s434
      %s436 = sphi 0, %s434
      %s437 = sphi 0, %s436
      %s451 = sphi 0, %s437
      %s457 = sphi 0, %s459
      %s460 = sphi 0, %s457
      %s461 = sphi 0, %s460
      %s477 = sphi 0, %s461
    $region4: #{tpu_custom_call.1} parent=1 // loop_header_branch
      %32 = sbr.rel (%p30) target = $region8
    $region5: #{tpu_custom_call.1} parent=1 // loop_body
      %s34 = ssub.s32 %s29, 1
      %s35 = ssub.s32 %s29, 2
      %s42 = sadd.s32 1, %s37
      %p43 = scmp.ge.s32.totalorder %s42, 2
      %s44 = scalar_select %p43, 0, %s42
      %s45 = sadd.s32 1, %s36
      %s46 = scalar_select %p43, %s45, %s36
      %p47 = scmp.ge.s32.totalorder %s46, 2
      %s48 = scalar_select %p47, 0, %s46
      %s49 = ssub.s32 %s36, %s48
      %p50 = scmp.eq.s32.totalorder %s49, 0
      %s52 = sadd.s32 %s51, 1
      %s53 = scalar_select %p50, %s51, %s52
      %p56 = pneg %p50
      %p57 = scmp.eq.s32.totalorder %s29, 3
      %p58 = por %p56, %p57
      %p59 = scmp.ne.s32.totalorder %s51, %s54
      %p60 = scmp.eq.s32.totalorder %s29, 0
      %p61 = por %p59, %p60
      %p62 = scmp.ne.s32.totalorder %s51, %s54
      %p63 = scmp.eq.s32.totalorder %s34, 3
      %p64 = por %p62, %p63
      %p65 = scmp.ne.s32.totalorder %s54, %s55
      %p66 = scmp.eq.s32.totalorder %s34, 0
      %p67 = por %p65, %p66
      %p68 = scmp.ne.s32.totalorder %s54, %s55
      %p69 = scmp.eq.s32.totalorder %s35, 3
      %p70 = por %p68, %p69
      %p72 = scmp.ne.s32.totalorder %s55, %s71
      %p73 = scmp.eq.s32.totalorder %s35, 0
      %p74 = por %p72, %p73
      %s75 = ssub.s32 %s36, %s48
      %p76 = scmp.eq.s32.totalorder %s75, 0
      %s78 = sadd.s32 %s77, 1
      %s79 = scalar_select %p76, %s77, %s78
      %p82 = pneg %p76
      %p83 = scmp.eq.s32.totalorder %s29, 3
      %p84 = por %p82, %p83
      %p85 = scmp.ne.s32.totalorder %s77, %s80
      %p86 = scmp.eq.s32.totalorder %s29, 0
      %p87 = por %p85, %p86
      %p88 = scmp.ne.s32.totalorder %s77, %s80
      %p89 = scmp.eq.s32.totalorder %s34, 3
      %p90 = por %p88, %p89
      %p91 = scmp.ne.s32.totalorder %s80, %s81
      %p92 = scmp.eq.s32.totalorder %s34, 0
      %p93 = por %p91, %p92
      %p94 = scmp.ne.s32.totalorder %s80, %s81
      %p95 = scmp.eq.s32.totalorder %s35, 3
      %p96 = por %p94, %p95
      %p98 = scmp.ne.s32.totalorder %s81, %s97
      %p99 = scmp.eq.s32.totalorder %s35, 0
      %p100 = por %p98, %p99
      %s101 = ssub.s32 %s37, %s44
      %p102 = scmp.eq.s32.totalorder %s101, 0
      %s104 = sadd.s32 %s103, 1
      %s105 = scalar_select %p102, %s103, %s104
      %p108 = pneg %p102
      %p109 = scmp.eq.s32.totalorder %s29, 3
      %p110 = por %p108, %p109
      %p111 = scmp.ne.s32.totalorder %s103, %s106
      %p112 = scmp.eq.s32.totalorder %s29, 0
      %p113 = por %p111, %p112
      %p114 = scmp.ne.s32.totalorder %s103, %s106
      %p115 = scmp.eq.s32.totalorder %s34, 3
      %p116 = por %p114, %p115
      %p117 = scmp.ne.s32.totalorder %s106, %s107
      %p118 = scmp.eq.s32.totalorder %s34, 0
      %p119 = por %p117, %p118
      %p120 = scmp.ne.s32.totalorder %s106, %s107
      %p121 = scmp.eq.s32.totalorder %s35, 3
      %p122 = por %p120, %p121
      %p124 = scmp.ne.s32.totalorder %s107, %s123
      %p125 = scmp.eq.s32.totalorder %s35, 0
      %p126 = por %p124, %p125
      %s127 = ssub.s32 %s37, %s44
      %p128 = scmp.eq.s32.totalorder %s127, 0
      %s130 = sadd.s32 %s129, 1
      %s131 = scalar_select %p128, %s129, %s130
      %p134 = pneg %p128
      %p135 = scmp.eq.s32.totalorder %s29, 3
      %p136 = por %p134, %p135
      %p137 = scmp.ne.s32.totalorder %s129, %s132
      %p138 = scmp.eq.s32.totalorder %s29, 0
      %p139 = por %p137, %p138
      %p140 = scmp.ne.s32.totalorder %s129, %s132
      %p141 = scmp.eq.s32.totalorder %s34, 3
      %p142 = por %p140, %p141
      %p143 = scmp.ne.s32.totalorder %s132, %s133
      %p144 = scmp.eq.s32.totalorder %s34, 0
      %p145 = por %p143, %p144
      %p146 = scmp.ne.s32.totalorder %s132, %s133
      %p147 = scmp.eq.s32.totalorder %s35, 3
      %p148 = por %p146, %p147
      %p150 = scmp.ne.s32.totalorder %s133, %s149
      %p151 = scmp.eq.s32.totalorder %s35, 0
      %p152 = por %p150, %p151
      %s153 = ssub.s32 %s37, %s44
      %p154 = scmp.eq.s32.totalorder %s153, 0
      %s156 = sadd.s32 %s155, 1
      %s157 = scalar_select %p154, %s155, %s156
      %p160 = pneg %p154
      %p161 = scmp.eq.s32.totalorder %s29, 3
      %p162 = por %p160, %p161
      %p163 = scmp.ne.s32.totalorder %s155, %s158
      %p164 = scmp.eq.s32.totalorder %s29, 0
      %p165 = por %p163, %p164
      %p166 = scmp.ne.s32.totalorder %s155, %s158
      %p167 = scmp.eq.s32.totalorder %s34, 3
      %p168 = por %p166, %p167
      %p169 = scmp.ne.s32.totalorder %s158, %s159
      %p170 = scmp.eq.s32.totalorder %s34, 0
      %p171 = por %p169, %p170
      %p172 = scmp.ne.s32.totalorder %s158, %s159
      %p173 = scmp.eq.s32.totalorder %s35, 3
      %p174 = por %p172, %p173
      %p176 = scmp.ne.s32.totalorder %s159, %s175
      %p177 = scmp.eq.s32.totalorder %s35, 0
      %p178 = por %p176, %p177
      %s179 = ssub.s32 %s37, %s44
      %p180 = scmp.eq.s32.totalorder %s179, 0
      %s182 = sadd.s32 %s181, 1
      %s183 = scalar_select %p180, %s181, %s182
      %p186 = pneg %p180
      %p187 = scmp.eq.s32.totalorder %s29, 3
      %p188 = por %p186, %p187
      %p189 = scmp.ne.s32.totalorder %s181, %s184
      %p190 = scmp.eq.s32.totalorder %s29, 0
      %p191 = por %p189, %p190
      %p192 = scmp.ne.s32.totalorder %s181, %s184
      %p193 = scmp.eq.s32.totalorder %s34, 3
      %p194 = por %p192, %p193
      %p195 = scmp.ne.s32.totalorder %s184, %s185
      %p196 = scmp.eq.s32.totalorder %s34, 0
      %p197 = por %p195, %p196
      %p198 = scmp.ne.s32.totalorder %s184, %s185
      %p199 = scmp.eq.s32.totalorder %s35, 3
      %p200 = por %p198, %p199
      %p202 = scmp.ne.s32.totalorder %s185, %s201
      %p203 = scmp.eq.s32.totalorder %s35, 0
      %p204 = por %p202, %p203
      %s205 = ssub.s32 %s37, %s44
      %p206 = scmp.eq.s32.totalorder %s205, 0
      %s208 = sadd.s32 %s207, 1
      %s209 = scalar_select %p206, %s207, %s208
      %p212 = pneg %p206
      %p213 = scmp.eq.s32.totalorder %s29, 3
      %p214 = por %p212, %p213
      %p215 = scmp.ne.s32.totalorder %s207, %s210
      %p216 = scmp.eq.s32.totalorder %s29, 0
      %p217 = por %p215, %p216
      %p218 = scmp.ne.s32.totalorder %s207, %s210
      %p219 = scmp.eq.s32.totalorder %s34, 3
      %p220 = por %p218, %p219
      %p221 = scmp.ne.s32.totalorder %s210, %s211
      %p222 = scmp.eq.s32.totalorder %s34, 0
      %p223 = por %p221, %p222
      %p224 = scmp.ne.s32.totalorder %s210, %s211
      %p225 = scmp.eq.s32.totalorder %s35, 3
      %p226 = por %p224, %p225
      %p228 = scmp.ne.s32.totalorder %s211, %s227
      %p229 = scmp.eq.s32.totalorder %s35, 0
      %p230 = por %p228, %p229
      %s231 = ssub.s32 %s37, %s44
      %p232 = scmp.eq.s32.totalorder %s231, 0
      %s234 = sadd.s32 %s233, 1
      %s235 = scalar_select %p232, %s233, %s234
      %p238 = pneg %p232
      %p239 = scmp.eq.s32.totalorder %s29, 3
      %p240 = por %p238, %p239
      %p241 = scmp.ne.s32.totalorder %s233, %s236
      %p242 = scmp.eq.s32.totalorder %s29, 0
      %p243 = por %p241, %p242
      %p244 = scmp.ne.s32.totalorder %s233, %s236
      %p245 = scmp.eq.s32.totalorder %s34, 3
      %p246 = por %p244, %p245
      %p247 = scmp.ne.s32.totalorder %s236, %s237
      %p248 = scmp.eq.s32.totalorder %s34, 0
      %p249 = por %p247, %p248
      %p250 = scmp.ne.s32.totalorder %s236, %s237
      %p251 = scmp.eq.s32.totalorder %s35, 3
      %p252 = por %p250, %p251
      %p254 = scmp.ne.s32.totalorder %s237, %s253
      %p255 = scmp.eq.s32.totalorder %s35, 0
      %p256 = por %p254, %p255
      %s257 = ssub.s32 %s37, %s44
      %p258 = scmp.eq.s32.totalorder %s257, 0
      %s260 = sadd.s32 %s259, 1
      %s261 = scalar_select %p258, %s259, %s260
      %p264 = pneg %p258
      %p265 = scmp.eq.s32.totalorder %s29, 3
      %p266 = por %p264, %p265
      %p267 = scmp.ne.s32.totalorder %s259, %s262
      %p268 = scmp.eq.s32.totalorder %s29, 0
      %p269 = por %p267, %p268
      %p270 = scmp.ne.s32.totalorder %s259, %s262
      %p271 = scmp.eq.s32.totalorder %s34, 3
      %p272 = por %p270, %p271
      %p273 = scmp.ne.s32.totalorder %s262, %s263
      %p274 = scmp.eq.s32.totalorder %s34, 0
      %p275 = por %p273, %p274
      %p276 = scmp.ne.s32.totalorder %s262, %s263
      %p277 = scmp.eq.s32.totalorder %s35, 3
      %p278 = por %p276, %p277
      %p280 = scmp.ne.s32.totalorder %s263, %s279
      %p281 = scmp.eq.s32.totalorder %s35, 0
      %p282 = por %p280, %p281
      %s283 = ssub.s32 %s37, %s44
      %p284 = scmp.eq.s32.totalorder %s283, 0
      %s286 = sadd.s32 %s285, 1
      %s287 = scalar_select %p284, %s285, %s286
      %p290 = pneg %p284
      %p291 = scmp.eq.s32.totalorder %s29, 3
      %p292 = por %p290, %p291
      %p293 = scmp.ne.s32.totalorder %s285, %s288
      %p294 = scmp.eq.s32.totalorder %s29, 0
      %p295 = por %p293, %p294
      %p296 = scmp.ne.s32.totalorder %s285, %s288
      %p297 = scmp.eq.s32.totalorder %s34, 3
      %p298 = por %p296, %p297
      %p299 = scmp.ne.s32.totalorder %s288, %s289
      %p300 = scmp.eq.s32.totalorder %s34, 0
      %p301 = por %p299, %p300
      %p302 = scmp.ne.s32.totalorder %s288, %s289
      %p303 = scmp.eq.s32.totalorder %s35, 3
      %p304 = por %p302, %p303
      %p306 = scmp.ne.s32.totalorder %s289, %s305
      %p307 = scmp.eq.s32.totalorder %s35, 0
      %p308 = por %p306, %p307
      %s309 = ssub.s32 %s37, %s44
      %p310 = scmp.eq.s32.totalorder %s309, 0
      %s312 = sadd.s32 %s311, 1
      %s313 = scalar_select %p310, %s311, %s312
      %p316 = pneg %p310
      %p317 = scmp.eq.s32.totalorder %s29, 3
      %p318 = por %p316, %p317
      %p319 = scmp.ne.s32.totalorder %s311, %s314
      %p320 = scmp.eq.s32.totalorder %s29, 0
      %p321 = por %p319, %p320
      %p322 = scmp.ne.s32.totalorder %s311, %s314
      %p323 = scmp.eq.s32.totalorder %s34, 3
      %p324 = por %p322, %p323
      %p325 = scmp.ne.s32.totalorder %s314, %s315
      %p326 = scmp.eq.s32.totalorder %s34, 0
      %p327 = por %p325, %p326
      %p328 = scmp.ne.s32.totalorder %s314, %s315
      %p329 = scmp.eq.s32.totalorder %s35, 3
      %p330 = por %p328, %p329
      %p332 = scmp.ne.s32.totalorder %s315, %s331
      %p333 = scmp.eq.s32.totalorder %s35, 0
      %p334 = por %p332, %p333
      %s335 = ssub.s32 %s37, %s44
      %p336 = scmp.eq.s32.totalorder %s335, 0
      %s338 = sadd.s32 %s337, 1
      %s339 = scalar_select %p336, %s337, %s338
      %p342 = pneg %p336
      %p343 = scmp.eq.s32.totalorder %s29, 3
      %p344 = por %p342, %p343
      %p345 = scmp.ne.s32.totalorder %s337, %s340
      %p346 = scmp.eq.s32.totalorder %s29, 0
      %p347 = por %p345, %p346
      %p348 = scmp.ne.s32.totalorder %s337, %s340
      %p349 = scmp.eq.s32.totalorder %s34, 3
      %p350 = por %p348, %p349
      %p351 = scmp.ne.s32.totalorder %s340, %s341
      %p352 = scmp.eq.s32.totalorder %s34, 0
      %p353 = por %p351, %p352
      %p354 = scmp.ne.s32.totalorder %s340, %s341
      %p355 = scmp.eq.s32.totalorder %s35, 3
      %p356 = por %p354, %p355
      %p358 = scmp.ne.s32.totalorder %s341, %s357
      %p359 = scmp.eq.s32.totalorder %s35, 0
      %p360 = por %p358, %p359
      %s361 = ssub.s32 %s37, %s44
      %p362 = scmp.eq.s32.totalorder %s361, 0
      %s364 = sadd.s32 %s363, 1
      %s365 = scalar_select %p362, %s363, %s364
      %p368 = pneg %p362
      %p369 = scmp.eq.s32.totalorder %s29, 3
      %p370 = por %p368, %p369
      %p371 = scmp.ne.s32.totalorder %s363, %s366
      %p372 = scmp.eq.s32.totalorder %s29, 0
      %p373 = por %p371, %p372
      %p374 = scmp.ne.s32.totalorder %s363, %s366
      %p375 = scmp.eq.s32.totalorder %s34, 3
      %p376 = por %p374, %p375
      %p377 = scmp.ne.s32.totalorder %s366, %s367
      %p378 = scmp.eq.s32.totalorder %s34, 0
      %p379 = por %p377, %p378
      %p380 = scmp.ne.s32.totalorder %s366, %s367
      %p381 = scmp.eq.s32.totalorder %s35, 3
      %p382 = por %p380, %p381
      %p384 = scmp.ne.s32.totalorder %s367, %s383
      %p385 = scmp.eq.s32.totalorder %s35, 0
      %p386 = por %p384, %p385
      %s387 = ssub.s32 %s37, %s44
      %p388 = scmp.eq.s32.totalorder %s387, 0
      %s390 = sadd.s32 %s389, 1
      %s391 = scalar_select %p388, %s389, %s390
      %p394 = pneg %p388
      %p395 = scmp.eq.s32.totalorder %s29, 3
      %p396 = por %p394, %p395
      %p397 = scmp.ne.s32.totalorder %s389, %s392
      %p398 = scmp.eq.s32.totalorder %s29, 0
      %p399 = por %p397, %p398
      %p400 = scmp.ne.s32.totalorder %s389, %s392
      %p401 = scmp.eq.s32.totalorder %s34, 3
      %p402 = por %p400, %p401
      %p403 = scmp.ne.s32.totalorder %s392, %s393
      %p404 = scmp.eq.s32.totalorder %s34, 0
      %p405 = por %p403, %p404
      %p406 = scmp.ne.s32.totalorder %s392, %s393
      %p407 = scmp.eq.s32.totalorder %s35, 3
      %p408 = por %p406, %p407
      %p410 = scmp.ne.s32.totalorder %s393, %s409
      %p411 = scmp.eq.s32.totalorder %s35, 0
      %p412 = por %p410, %p411
      %s414 = sadd.s32 %s413, 1
      %p417 = scmp.eq.s32.totalorder %s29, 3
      %p418 = scmp.ne.s32.totalorder %s413, %s415
      %p419 = scmp.eq.s32.totalorder %s29, 0
      %p420 = por %p418, %p419
      %p421 = scmp.ne.s32.totalorder %s413, %s415
      %p422 = scmp.eq.s32.totalorder %s34, 3
      %p423 = por %p421, %p422
      %p424 = scmp.ne.s32.totalorder %s415, %s416
      %p425 = scmp.eq.s32.totalorder %s34, 0
      %p426 = por %p424, %p425
      %p427 = scmp.ne.s32.totalorder %s415, %s416
      %p428 = scmp.eq.s32.totalorder %s35, 3
      %p429 = por %p427, %p428
      %p431 = scmp.ne.s32.totalorder %s416, %s430
      %p432 = scmp.eq.s32.totalorder %s35, 0
      %p433 = por %p431, %p432
      %s435 = sadd.s32 %s434, 1
      %p438 = scmp.eq.s32.totalorder %s29, 3
      %p439 = scmp.ne.s32.totalorder %s434, %s436
      %p440 = scmp.eq.s32.totalorder %s29, 0
      %p441 = por %p439, %p440
      %p442 = scmp.ne.s32.totalorder %s434, %s436
      %p443 = scmp.eq.s32.totalorder %s34, 3
      %p444 = por %p442, %p443
      %p445 = scmp.ne.s32.totalorder %s436, %s437
      %p446 = scmp.eq.s32.totalorder %s34, 0
      %p447 = por %p445, %p446
      %p448 = scmp.ne.s32.totalorder %s436, %s437
      %p449 = scmp.eq.s32.totalorder %s35, 3
      %p450 = por %p448, %p449
      %p452 = scmp.ne.s32.totalorder %s437, %s451
      %p453 = scmp.eq.s32.totalorder %s35, 0
      %p454 = por %p452, %p453
      %s455 = ssub.s32 %s36, %s48
      %p456 = scmp.eq.s32.totalorder %s455, 0
      %s458 = sadd.s32 %s457, 1
      %s459 = scalar_select %p456, %s457, %s458
      %p462 = pneg %p456
      %p463 = scmp.eq.s32.totalorder %s29, 3
      %p464 = por %p462, %p463
      %p465 = scmp.ne.s32.totalorder %s457, %s460
      %p466 = scmp.eq.s32.totalorder %s29, 0
      %p467 = por %p465, %p466
      %p468 = scmp.ne.s32.totalorder %s457, %s460
      %p469 = scmp.eq.s32.totalorder %s34, 3
      %p470 = por %p468, %p469
      %p471 = scmp.ne.s32.totalorder %s460, %s461
      %p472 = scmp.eq.s32.totalorder %s34, 0
      %p473 = por %p471, %p472
      %p474 = scmp.ne.s32.totalorder %s460, %s461
      %p475 = scmp.eq.s32.totalorder %s35, 3
      %p476 = por %p474, %p475
      %p478 = scmp.ne.s32.totalorder %s461, %s477
      %p479 = scmp.eq.s32.totalorder %s35, 0
      %p480 = por %p478, %p479
      %p481 = scmp.le.s32.totalorder 1, %s29
      %p482 = scmp.lt.s32.totalorder %s29, 5
      %p483 = pnand %p481, %p482
      %p484 = pneg %p483
      // Predicated region
      $region9: #{tpu_custom_call.1} parent=5 // pred_check
        _
      $region10: #{tpu_custom_call.1} parent=5 // pred_check_branch
        %486 = sbr.rel (%p483) target = $region12
      $region11: #{tpu_custom_call.1} parent=5 // pred_region
        %s487 = ssub.s32 %s29, 1
        // Predicated region
        $region13: #{tpu_custom_call.1} parent=11 // pred_check
          %p488 = pneg %p426
        $region14: #{tpu_custom_call.1} parent=11 // pred_check_branch
          %490 = sbr.rel (%p488) target = $region16
        $region15: #{tpu_custom_call.1} parent=11 // pred_region
          _
        $region16: #{tpu_custom_call.1} parent=11 // pred_fallthru
          _
        // Predicated region
        $region17: #{tpu_custom_call.1} parent=11 // pred_check
          %p491 = pneg %p447
        $region18: #{tpu_custom_call.1} parent=11 // pred_check_branch
          %493 = sbr.rel (%p491) target = $region20
        $region19: #{tpu_custom_call.1} parent=11 // pred_region
          _
        $region20: #{tpu_custom_call.1} parent=11 // pred_fallthru
          _
      $region12: #{tpu_custom_call.1} parent=5 // pred_fallthru
        _
      %p494 = scmp.lt.s32.totalorder %s29, 4
      // Predicated region
      $region21: #{tpu_custom_call.1} parent=5 // pred_check
        %p495 = pneg %p494
      $region22: #{tpu_custom_call.1} parent=5 // pred_check_branch
        %497 = sbr.rel (%p495) target = $region24
      $region23: #{tpu_custom_call.1} parent=5 // pred_region
        // Predicated region
        $region25: #{tpu_custom_call.1} parent=23 // pred_check
          %p498 = pneg %p61
        $region26: #{tpu_custom_call.1} parent=23 // pred_check_branch
          %500 = sbr.rel (%p498) target = $region28
        $region27: #{tpu_custom_call.1} parent=23 // pred_region
          %s501 = sand.u32 %s51, 1
          %s502 = scalar_lea.sflag [#allocation5], %s501
          %s503 = sand.u32 %s51, 1
          %s504 = smul.addr %s503, 4
          %s505 = scalar_lea.vmem [#allocation4], %s504
          %s507 = ssub.s32 64, 64
          %508 = vsyncadd %s502, %s507
          %s509 = smul.addr %s36, 64
          %s510 = scalar_lea.hbm %s0, %s509
          %s512 = sshll.u32 %s505, 4
          %s513 = int_to_ptr.vmem [resolvable:$true] %s512
          %515 = dma.hbm_to_vmem [thread:$0]  %s510, 64, %s513, %s502
        $region28: #{tpu_custom_call.1} parent=23 // pred_fallthru
          _
        // Predicated region
        $region29: #{tpu_custom_call.1} parent=23 // pred_check
          %p516 = pneg %p87
        $region30: #{tpu_custom_call.1} parent=23 // pred_check_branch
          %518 = sbr.rel (%p516) target = $region32
        $region31: #{tpu_custom_call.1} parent=23 // pred_region
          %p519 = scmp.lt.s32.totalorder %s36, 1
          %s520 = scalar_select %p519, %s36, 1
          %s521 = scalar_lea.vmem %s1, %s520
        $region32: #{tpu_custom_call.1} parent=23 // pred_fallthru
          _
        // Predicated region
        $region33: #{tpu_custom_call.1} parent=23 // pred_check
          %p522 = pneg %p113
        $region34: #{tpu_custom_call.1} parent=23 // pred_check_branch
          %524 = sbr.rel (%p522) target = $region36
        $region35: #{tpu_custom_call.1} parent=23 // pred_region
          %p525 = scmp.lt.s32.totalorder %s37, 1
          %s526 = scalar_select %p525, %s37, 1
          %s527 = smul.addr %s526, 4
          %s528 = smul.addr %s527, 4
          %s529 = scalar_lea.vmem %s2, %s528
        $region36: #{tpu_custom_call.1} parent=23 // pred_fallthru
          _
        // Predicated region
        $region37: #{tpu_custom_call.1} parent=23 // pred_check
          %p530 = pneg %p139
        $region38: #{tpu_custom_call.1} parent=23 // pred_check_branch
          %532 = sbr.rel (%p530) target = $region40
        $region39: #{tpu_custom_call.1} parent=23 // pred_region
          %p533 = scmp.lt.s32.totalorder %s37, 1
          %s534 = scalar_select %p533, %s37, 1
          %s535 = scalar_lea.vmem %s3, %s534
        $region40: #{tpu_custom_call.1} parent=23 // pred_fallthru
          _
        // Predicated region
        $region41: #{tpu_custom_call.1} parent=23 // pred_check
          %p536 = pneg %p165
        $region42: #{tpu_custom_call.1} parent=23 // pred_check_branch
          %538 = sbr.rel (%p536) target = $region44
        $region43: #{tpu_custom_call.1} parent=23 // pred_region
          %p539 = scmp.lt.s32.totalorder %s37, 1
          %s540 = scalar_select %p539, %s37, 1
          %s541 = smul.addr %s540, 4
          %s542 = smul.addr %s541, 4
          %s543 = scalar_lea.vmem %s4, %s542
        $region44: #{tpu_custom_call.1} parent=23 // pred_fallthru
          _
        // Predicated region
        $region45: #{tpu_custom_call.1} parent=23 // pred_check
          %p544 = pneg %p191
        $region46: #{tpu_custom_call.1} parent=23 // pred_check_branch
          %546 = sbr.rel (%p544) target = $region48
        $region47: #{tpu_custom_call.1} parent=23 // pred_region
          %p547 = scmp.lt.s32.totalorder %s37, 1
          %s548 = scalar_select %p547, %s37, 1
          %s549 = scalar_lea.vmem %s5, %s548
        $region48: #{tpu_custom_call.1} parent=23 // pred_fallthru
          _
        // Predicated region
        $region49: #{tpu_custom_call.1} parent=23 // pred_check
          %p550 = pneg %p217
        $region50: #{tpu_custom_call.1} parent=23 // pred_check_branch
          %552 = sbr.rel (%p550) target = $region52
        $region51: #{tpu_custom_call.1} parent=23 // pred_region
          %p553 = scmp.lt.s32.totalorder %s37, 1
          %s554 = scalar_select %p553, %s37, 1
          %s555 = scalar_lea.vmem %s6, %s554
        $region52: #{tpu_custom_call.1} parent=23 // pred_fallthru
          _
        // Predicated region
        $region53: #{tpu_custom_call.1} parent=23 // pred_check
          %p556 = pneg %p243
        $region54: #{tpu_custom_call.1} parent=23 // pred_check_branch
          %558 = sbr.rel (%p556) target = $region56
        $region55: #{tpu_custom_call.1} parent=23 // pred_region
          %p559 = scmp.lt.s32.totalorder %s37, 1
          %s560 = scalar_select %p559, %s37, 1
          %s561 = scalar_lea.vmem %s7, %s560
        $region56: #{tpu_custom_call.1} parent=23 // pred_fallthru
          _
        // Predicated region
        $region57: #{tpu_custom_call.1} parent=23 // pred_check
          %p562 = pneg %p269
        $region58: #{tpu_custom_call.1} parent=23 // pred_check_branch
          %564 = sbr.rel (%p562) target = $region60
        $region59: #{tpu_custom_call.1} parent=23 // pred_region
          %p565 = scmp.lt.s32.totalorder %s37, 1
          %s566 = scalar_select %p565, %s37, 1
          %s567 = smul.addr %s566, 4
          %s568 = smul.addr %s567, 4
          %s569 = scalar_lea.vmem %s8, %s568
        $region60: #{tpu_custom_call.1} parent=23 // pred_fallthru
          _
        // Predicated region
        $region61: #{tpu_custom_call.1} parent=23 // pred_check
          %p570 = pneg %p295
        $region62: #{tpu_custom_call.1} parent=23 // pred_check_branch
          %572 = sbr.rel (%p570) target = $region64
        $region63: #{tpu_custom_call.1} parent=23 // pred_region
          %p573 = scmp.lt.s32.totalorder %s37, 1
          %s574 = scalar_select %p573, %s37, 1
          %s575 = scalar_lea.vmem %s9, %s574
        $region64: #{tpu_custom_call.1} parent=23 // pred_fallthru
          _
        // Predicated region
        $region65: #{tpu_custom_call.1} parent=23 // pred_check
          %p576 = pneg %p321
        $region66: #{tpu_custom_call.1} parent=23 // pred_check_branch
          %578 = sbr.rel (%p576) target = $region68
        $region67: #{tpu_custom_call.1} parent=23 // pred_region
          %p579 = scmp.lt.s32.totalorder %s37, 1
          %s580 = scalar_select %p579, %s37, 1
          %s581 = smul.addr %s580, 8
          %s582 = smul.addr %s581, 4
          %s583 = scalar_lea.vmem %s10, %s582
        $region68: #{tpu_custom_call.1} parent=23 // pred_fallthru
          _
        // Predicated region
        $region69: #{tpu_custom_call.1} parent=23 // pred_check
          %p584 = pneg %p347
        $region70: #{tpu_custom_call.1} parent=23 // pred_check_branch
          %586 = sbr.rel (%p584) target = $region72
        $region71: #{tpu_custom_call.1} parent=23 // pred_region
          %p587 = scmp.lt.s32.totalorder %s37, 1
          %s588 = scalar_select %p587, %s37, 1
          %s589 = scalar_lea.vmem %s11, %s588
        $region72: #{tpu_custom_call.1} parent=23 // pred_fallthru
          _
        // Predicated region
        $region73: #{tpu_custom_call.1} parent=23 // pred_check
          %p590 = pneg %p373
        $region74: #{tpu_custom_call.1} parent=23 // pred_check_branch
          %592 = sbr.rel (%p590) target = $region76
        $region75: #{tpu_custom_call.1} parent=23 // pred_region
          %p593 = scmp.lt.s32.totalorder %s37, 1
          %s594 = scalar_select %p593, %s37, 1
          %s595 = scalar_lea.vmem %s12, %s594
        $region76: #{tpu_custom_call.1} parent=23 // pred_fallthru
          _
        // Predicated region
        $region77: #{tpu_custom_call.1} parent=23 // pred_check
          %p596 = pneg %p399
        $region78: #{tpu_custom_call.1} parent=23 // pred_check_branch
          %598 = sbr.rel (%p596) target = $region80
        $region79: #{tpu_custom_call.1} parent=23 // pred_region
          %p599 = scmp.lt.s32.totalorder %s37, 1
          %s600 = scalar_select %p599, %s37, 1
          %s601 = scalar_lea.vmem %s13, %s600
        $region80: #{tpu_custom_call.1} parent=23 // pred_fallthru
          _
      $region24: #{tpu_custom_call.1} parent=5 // pred_fallthru
        _
      %p602 = scmp.le.s32.totalorder 1, %s29
      %p603 = scmp.lt.s32.totalorder %s29, 5
      %p604 = pnand %p602, %p603
      %p605 = pneg %p604
      // Predicated region
      $region81: #{tpu_custom_call.1} parent=5 // pred_check
        _
      $region82: #{tpu_custom_call.1} parent=5 // pred_check_branch
        %607 = sbr.rel (%p604) target = $region84
      $region83: #{tpu_custom_call.1} parent=5 // pred_region
        %s608 = ssub.s32 %s29, 1
        %s609 = sand.u32 %s54, 1
        %s610 = scalar_lea.sflag [#allocation5], %s609
        %s611 = sand.u32 %s54, 1
        %s612 = smul.addr %s611, 4
        %s613 = scalar_lea.vmem [#allocation4], %s612
        // Predicated region
        $region85: #{tpu_custom_call.1} parent=83 // pred_check
          %p614 = pneg %p67
        $region86: #{tpu_custom_call.1} parent=83 // pred_check_branch
          %616 = sbr.rel (%p614) target = $region88
        $region87: #{tpu_custom_call.1} parent=83 // pred_region
          %617 = dma.done %s610, 64
        $region88: #{tpu_custom_call.1} parent=83 // pred_fallthru
          _
        %s618 = sand.u32 %s54, 1
        %s619 = scalar_lea.sflag [#allocation5], %s618
        %s620 = sand.u32 %s54, 1
        %s621 = smul.addr %s620, 4
        %s622 = scalar_lea.vmem [#allocation4], %s621
        %p623 = pneg %p67
        %p624 = pneg %p64
        %p625 = scmp.lt.s32.totalorder %s38, 1
        %s626 = scalar_select %p625, %s38, 1
        %s627 = scalar_lea.vmem %s1, %s626
        %p628 = pneg %p93
        %p629 = pneg %p90
        %p630 = scmp.lt.s32.totalorder %s39, 1
        %s631 = scalar_select %p630, %s39, 1
        %s632 = smul.addr %s631, 4
        %s633 = smul.addr %s632, 4
        %s634 = scalar_lea.vmem %s2, %s633
        %p635 = pneg %p119
        %p636 = pneg %p116
        %p637 = scmp.lt.s32.totalorder %s39, 1
        %s638 = scalar_select %p637, %s39, 1
        %s639 = scalar_lea.vmem %s3, %s638
        %p640 = pneg %p145
        %p641 = pneg %p142
        %p642 = scmp.lt.s32.totalorder %s39, 1
        %s643 = scalar_select %p642, %s39, 1
        %s644 = smul.addr %s643, 4
        %s645 = smul.addr %s644, 4
        %s646 = scalar_lea.vmem %s4, %s645
        %p647 = pneg %p171
        %p648 = pneg %p168
        %p649 = scmp.lt.s32.totalorder %s39, 1
        %s650 = scalar_select %p649, %s39, 1
        %s651 = scalar_lea.vmem %s5, %s650
        %p652 = pneg %p197
        %p653 = pneg %p194
        %p654 = scmp.lt.s32.totalorder %s39, 1
        %s655 = scalar_select %p654, %s39, 1
        %s656 = scalar_lea.vmem %s6, %s655
        %p657 = pneg %p223
        %p658 = pneg %p220
        %p659 = scmp.lt.s32.totalorder %s39, 1
        %s660 = scalar_select %p659, %s39, 1
        %s661 = scalar_lea.vmem %s7, %s660
        %p662 = pneg %p249
        %p663 = pneg %p246
        %p664 = scmp.lt.s32.totalorder %s39, 1
        %s665 = scalar_select %p664, %s39, 1
        %s666 = smul.addr %s665, 4
        %s667 = smul.addr %s666, 4
        %s668 = scalar_lea.vmem %s8, %s667
        %p669 = pneg %p275
        %p670 = pneg %p272
        %p671 = scmp.lt.s32.totalorder %s39, 1
        %s672 = scalar_select %p671, %s39, 1
        %s673 = scalar_lea.vmem %s9, %s672
        %p674 = pneg %p301
        %p675 = pneg %p298
        %p676 = scmp.lt.s32.totalorder %s39, 1
        %s677 = scalar_select %p676, %s39, 1
        %s678 = smul.addr %s677, 8
        %s679 = smul.addr %s678, 4
        %s680 = scalar_lea.vmem %s10, %s679
        %p681 = pneg %p327
        %p682 = pneg %p324
        %p683 = scmp.lt.s32.totalorder %s39, 1
        %s684 = scalar_select %p683, %s39, 1
        %s685 = scalar_lea.vmem %s11, %s684
        %p686 = pneg %p353
        %p687 = pneg %p350
        %p688 = scmp.lt.s32.totalorder %s39, 1
        %s689 = scalar_select %p688, %s39, 1
        %s690 = scalar_lea.vmem %s12, %s689
        %p691 = pneg %p379
        %p692 = pneg %p376
        %p693 = scmp.lt.s32.totalorder %s39, 1
        %s694 = scalar_select %p693, %s39, 1
        %s695 = scalar_lea.vmem %s13, %s694
        %p696 = pneg %p405
        %p697 = pneg %p402
        %p698 = pneg %p426
        %p699 = pneg %p423
        %p700 = pneg %p447
        %p701 = pneg %p444
        %p702 = pneg %p473
        %p703 = pneg %p470
        %s704 = sand.u32 %s460, 1
        %s705 = scalar_lea.sflag [#allocation6], %s704
        %s706 = sand.u32 %s460, 1
        %s707 = scalar_lea.vmem [#allocation7], %s706
        %p708 = scmp.lt.s32.totalorder %s38, 1
        %s709 = scalar_select %p708, %s38, 1
        %s710 = scalar_lea.vmem %s1, %s709
        %p711 = scmp.lt.s32.totalorder %s39, 1
        %s712 = scalar_select %p711, %s39, 1
        %s713 = smul.addr %s712, 4
        %s714 = smul.addr %s713, 4
        %s715 = scalar_lea.vmem %s2, %s714
        %p716 = scmp.lt.s32.totalorder %s39, 1
        %s717 = scalar_select %p716, %s39, 1
        %s718 = scalar_lea.vmem %s3, %s717
        %p719 = scmp.lt.s32.totalorder %s39, 1
        %s720 = scalar_select %p719, %s39, 1
        %s721 = smul.addr %s720, 4
        %s722 = smul.addr %s721, 4
        %s723 = scalar_lea.vmem %s4, %s722
        %p724 = scmp.lt.s32.totalorder %s39, 1
        %s725 = scalar_select %p724, %s39, 1
        %s726 = scalar_lea.vmem %s5, %s725
        %p727 = scmp.lt.s32.totalorder %s39, 1
        %s728 = scalar_select %p727, %s39, 1
        %s729 = scalar_lea.vmem %s6, %s728
        %p730 = scmp.lt.s32.totalorder %s39, 1
        %s731 = scalar_select %p730, %s39, 1
        %s732 = scalar_lea.vmem %s7, %s731
        %p733 = scmp.lt.s32.totalorder %s39, 1
        %s734 = scalar_select %p733, %s39, 1
        %s735 = smul.addr %s734, 4
        %s736 = smul.addr %s735, 4
        %s737 = scalar_lea.vmem %s8, %s736
        %p738 = scmp.lt.s32.totalorder %s39, 1
        %s739 = scalar_select %p738, %s39, 1
        %s740 = scalar_lea.vmem %s9, %s739
        %p741 = scmp.lt.s32.totalorder %s39, 1
        %s742 = scalar_select %p741, %s39, 1
        %s743 = smul.addr %s742, 8
        %s744 = smul.addr %s743, 4
        %s745 = scalar_lea.vmem %s10, %s744
        %p746 = scmp.lt.s32.totalorder %s39, 1
        %s747 = scalar_select %p746, %s39, 1
        %s748 = scalar_lea.vmem %s11, %s747
        %p749 = scmp.lt.s32.totalorder %s39, 1
        %s750 = scalar_select %p749, %s39, 1
        %s751 = scalar_lea.vmem %s12, %s750
        %p752 = scmp.lt.s32.totalorder %s39, 1
        %s753 = scalar_select %p752, %s39, 1
        %s754 = scalar_lea.vmem %s13, %s753
        %p756 = scmp.eq.s32.totalorder %s39, 0
        // Predicated region
        $region89: #{tpu_custom_call.1} parent=83 // pred_check
          %p757 = pneg %p756
        $region90: #{tpu_custom_call.1} parent=83 // pred_check_branch
          %759 = sbr.rel (%p757) target = $region92
        $region91: #{tpu_custom_call.1} parent=83 // pred_region
          %v760 = vld [vmem:[%s613] sm:$0xf]
          %v761 = vunpack.c.l.bf16 %v760
          %vm762 = vcmask 261120
          %763 = vst.msk [vmem:[#allocation2] sm:$0xff] %vm762, %v761
        $region92: #{tpu_custom_call.1} parent=83 // pred_fallthru
          _
        %v764 = vld [vmem:[#allocation2] sm:$0xff]
        %v765 = vpack.c.bf16 %v764, %v764
        %v766 = vld [vmem:[%s715] sm:$0xf]
        %v767 = vld [vmem:[%s715 + $0x4] sm:$0xf]
        %v768 = vld [vmem:[%s715 + $0x8] sm:$0xf]
        %v769 = vld [vmem:[%s715 + $0xc] sm:$0xf]
        %v770 = vld [vmem:[%s718] sm:$0x1]
        %v772 = vlaneseq
        %v773 = vshrl.u32 %v772, 7
        %v774 = vsub.s32 0, %v773
        %v775 = vrot.slane %v770, %v774
        %v781 = vunpack.c.l.b16 %v766
        %v782 = vunpack.c.l.b16 %v767
        %v783 = vunpack.c.l.b16 %v768
        %v784 = vunpack.c.l.b16 %v769
        %v785 = vpack.c.b16 %v782, %v781
        %v786 = vpack.c.b16 %v784, %v783
        %vm789 = vcmask 261120
        %v791 = vsel %vm789, %v765, 0
        %793 = vmatprep.subr.bf16.mxu0 0
        %794 = vmatpush1.bf16.msra.mxu0 0
        %795 = vmatprep.subr.bf16.mxu0 0
        %796 = vmatpush1.bf16.msra.mxu0 0
        %797 = vmatprep.subr.bf16.mxu0 0
        %798 = vmatpush1.bf16.msra.mxu0 0
        %799 = vmatprep.subr.bf16.mxu0 0
        %800 = vmatpush1.bf16.msra.mxu0 0
        %801 = vmatprep.subr.bf16.mxu0 0
        %802 = vmatpush1.bf16.msra.mxu0 0
        %803 = vmatprep.subr.bf16.mxu0 0
        %804 = vmatpush1.bf16.msra.mxu0 0
        %805 = vmatprep.subr.bf16.mxu0 0
        %806 = vmatpush1.bf16.msra.mxu0 %v786
        %807 = vmatprep.subr.bf16.mxu0 0
        %808 = vmatpush1.bf16.msra.mxu0 %v785
        %809 = vmatprep.subr.bf16.mxu0 0
        %810 = vmatpush2.bf16.msra.mxu0 0
        %811 = vmatprep.subr.bf16.mxu0 0
        %812 = vmatpush2.bf16.msra.mxu0 0
        %813 = vmatprep.subr.bf16.mxu0 0
        %814 = vmatpush2.bf16.msra.mxu0 0
        %815 = vmatprep.subr.bf16.mxu0 0
        %816 = vmatpush2.bf16.msra.mxu0 0
        %817 = vmatprep.subr.bf16.mxu0 0
        %818 = vmatpush2.bf16.msra.mxu0 0
        %819 = vmatprep.subr.bf16.mxu0 0
        %820 = vmatpush2.bf16.msra.mxu0 0
        %821 = vmatprep.subr.bf16.mxu0 0
        %822 = vmatpush2.bf16.msra.mxu0 0
        %823 = vmatprep.subr.bf16.mxu0 0
        %824 = vmatpush2.bf16.msra.mxu0 0
        %825 = vmatprep.mubr.bf16.mxu0 0
        %826 = vmatmul.mubr.bf16.gmra.mxu0 %v791
        %v827 = vpop.f32.mrf.mxu0
        %v828 = vadd.f32 %v775, %v827
        %v829 = vpop.f32.mrf.mxu0
        %v830 = vpop.f32.mrf.mxu0
        %v831 = vpop.f32.mrf.mxu0
        %832 = vdwg.mxu0
        %v833 = vpack.c.bf16 %v828, %v828
        %v834 = vld [vmem:[%s710] sm:$0x1]
        %v835 = vld [vmem:[%s723] sm:$0xf]
        %v836 = vld [vmem:[%s723 + $0x4] sm:$0xf]
        %v837 = vld [vmem:[%s723 + $0x8] sm:$0xf]
        %v838 = vld [vmem:[%s723 + $0xc] sm:$0xf]
        %v840 = vlaneseq
        %v841 = vshrl.u32 %v840, 7
        %v842 = vsub.s32 0, %v841
        %v843 = vrot.slane %v834, %v842
        %846 = vrot.lane.b32.xlu0 %v833, 96
        %v847 = vpop.permute.xlu0 %846
        %vm848 = vcmask 64512
        %v850 = vsel %vm848, %v833, 0
        %v853 = vsel %vm848, %v847, 0
        %855 = vmatprep.subr.bf16.mxu0 0
        %856 = vmatpush1.bf16.xpose.msra.mxu0 0
        %857 = vmatprep.subr.bf16.mxu0 0
        %858 = vmatpush1.bf16.xpose.msra.mxu0 0
        %859 = vmatprep.subr.bf16.mxu0 0
        %860 = vmatpush1.bf16.xpose.msra.mxu0 0
        %861 = vmatprep.subr.bf16.mxu0 0
        %862 = vmatpush1.bf16.xpose.msra.mxu0 0
        %863 = vmatprep.subr.bf16.mxu0 0
        %864 = vmatpush1.bf16.xpose.msra.mxu0 0
        %865 = vmatprep.subr.bf16.mxu0 0
        %866 = vmatpush1.bf16.xpose.msra.mxu0 0
        %867 = vmatprep.subr.bf16.mxu0 0
        %868 = vmatpush1.bf16.xpose.msra.mxu0 0
        %869 = vmatprep.subr.bf16.mxu0 0
        %870 = vmatpush1.bf16.xpose.msra.mxu0 %v853
        %871 = vmatprep.subr.bf16.mxu0 0
        %872 = vmatpush2.bf16.xpose.msra.mxu0 0
        %873 = vmatprep.subr.bf16.mxu0 0
        %874 = vmatpush2.bf16.xpose.msra.mxu0 0
        %875 = vmatprep.subr.bf16.mxu0 0
        %876 = vmatpush2.bf16.xpose.msra.mxu0 0
        %877 = vmatprep.subr.bf16.mxu0 0
        %878 = vmatpush2.bf16.xpose.msra.mxu0 0
        %879 = vmatprep.subr.bf16.mxu0 0
        %880 = vmatpush2.bf16.xpose.msra.mxu0 0
        %881 = vmatprep.subr.bf16.mxu0 0
        %882 = vmatpush2.bf16.xpose.msra.mxu0 0
        %883 = vmatprep.subr.bf16.mxu0 0
        %884 = vmatpush2.bf16.xpose.msra.mxu0 0
        %885 = vmatprep.subr.bf16.mxu0 0
        %886 = vmatpush2.bf16.xpose.msra.mxu0 0
        %887 = vmatprep.mubr.bf16.mxu0 0
        %888 = vmatmul.mubr.bf16.gmra.mxu0 %v850
        %v889 = vpop.f32.mrf.mxu0
        %v890 = vadd.f32 %v843, %v889
        %v891 = vpop.f32.mrf.mxu0
        %v892 = vpop.f32.mrf.mxu0
        %v893 = vpop.f32.mrf.mxu0
        %894 = vdwg.mxu0
        %v895 = vsel %vm848, %v890, -inf
        %896 = vmax.xlane.f32.xlu0 %v895
        %v897 = vpop.xlane.xlu0 %896
        %v898 = vsub.f32 %v890, %v897
        %v899 = vmul.f32 %v898, 1.442695
        %v900 = vpow.pop %v899
        %v901 = vsel %vm848, %v900, 0.0
        %902 = vadd.xlane.f32.xlu0 %v901
        %v903 = vpop.xlane.xlu0 %902
        %v904 = vrcp.pop %v903
        %v905 = vmul.f32 %v900, %v904
        %v906 = vpack.c.bf16 %v905, %v905
        %907 = vrot.lane.b32.xlu0 %v833, 64
        %v908 = vpop.permute.xlu0 %907
        %v910 = vsel %vm848, %v906, 0
        %vm912 = vcmask 1043456
        %v914 = vsel %vm912, %v908, 0
        %916 = vmatprep.subr.bf16.mxu0 0
        %917 = vmatpush1.bf16.msra.mxu0 0
        %918 = vmatprep.subr.bf16.mxu0 0
        %919 = vmatpush1.bf16.msra.mxu0 0
        %920 = vmatprep.subr.bf16.mxu0 0
        %921 = vmatpush1.bf16.msra.mxu0 0
        %922 = vmatprep.subr.bf16.mxu0 0
        %923 = vmatpush1.bf16.msra.mxu0 0
        %924 = vmatprep.subr.bf16.mxu0 0
        %925 = vmatpush1.bf16.msra.mxu0 0
        %926 = vmatprep.subr.bf16.mxu0 0
        %927 = vmatpush1.bf16.msra.mxu0 0
        %928 = vmatprep.subr.bf16.mxu0 0
        %929 = vmatpush1.bf16.msra.mxu0 0
        %930 = vmatprep.subr.bf16.mxu0 0
        %931 = vmatpush1.bf16.msra.mxu0 %v914
        %932 = vmatprep.subr.bf16.mxu0 0
        %933 = vmatpush2.bf16.msra.mxu0 0
        %934 = vmatprep.subr.bf16.mxu0 0
        %935 = vmatpush2.bf16.msra.mxu0 0
        %936 = vmatprep.subr.bf16.mxu0 0
        %937 = vmatpush2.bf16.msra.mxu0 0
        %938 = vmatprep.subr.bf16.mxu0 0
        %939 = vmatpush2.bf16.msra.mxu0 0
        %940 = vmatprep.subr.bf16.mxu0 0
        %941 = vmatpush2.bf16.msra.mxu0 0
        %942 = vmatprep.subr.bf16.mxu0 0
        %943 = vmatpush2.bf16.msra.mxu0 0
        %944 = vmatprep.subr.bf16.mxu0 0
        %945 = vmatpush2.bf16.msra.mxu0 0
        %946 = vmatprep.subr.bf16.mxu0 0
        %947 = vmatpush2.bf16.msra.mxu0 0
        %948 = vmatprep.mubr.bf16.mxu0 0
        %949 = vmatmul.mubr.bf16.gmra.mxu0 %v910
        %v950 = vpop.f32.mrf.mxu0
        %v951 = vadd.f32 0.0, %v950
        %v952 = vpop.f32.mrf.mxu0
        %v953 = vpop.f32.mrf.mxu0
        %v954 = vpop.f32.mrf.mxu0
        %955 = vdwg.mxu0
        %v956 = vpack.c.bf16 %v951, %v951
        %957 = vrot.lane.b32.xlu0 %v833, 120
        %v958 = vpop.permute.xlu0 %957
        %959 = vrot.lane.b32.xlu0 %v833, 88
        %v960 = vpop.permute.xlu0 %959
        %v962 = vsel %vm848, %v958, 0
        %v965 = vsel %vm848, %v960, 0
        %967 = vmatprep.subr.bf16.mxu0 0
        %968 = vmatpush1.bf16.xpose.msra.mxu0 0
        %969 = vmatprep.subr.bf16.mxu0 0
        %970 = vmatpush1.bf16.xpose.msra.mxu0 0
        %971 = vmatprep.subr.bf16.mxu0 0
        %972 = vmatpush1.bf16.xpose.msra.mxu0 0
        %973 = vmatprep.subr.bf16.mxu0 0
        %974 = vmatpush1.bf16.xpose.msra.mxu0 0
        %975 = vmatprep.subr.bf16.mxu0 0
        %976 = vmatpush1.bf16.xpose.msra.mxu0 0
        %977 = vmatprep.subr.bf16.mxu0 0
        %978 = vmatpush1.bf16.xpose.msra.mxu0 0
        %979 = vmatprep.subr.bf16.mxu0 0
        %980 = vmatpush1.bf16.xpose.msra.mxu0 0
        %981 = vmatprep.subr.bf16.mxu0 0
        %982 = vmatpush1.bf16.xpose.msra.mxu0 %v965
        %983 = vmatprep.subr.bf16.mxu0 0
        %984 = vmatpush2.bf16.xpose.msra.mxu0 0
        %985 = vmatprep.subr.bf16.mxu0 0
        %986 = vmatpush2.bf16.xpose.msra.mxu0 0
        %987 = vmatprep.subr.bf16.mxu0 0
        %988 = vmatpush2.bf16.xpose.msra.mxu0 0
        %989 = vmatprep.subr.bf16.mxu0 0
        %990 = vmatpush2.bf16.xpose.msra.mxu0 0
        %991 = vmatprep.subr.bf16.mxu0 0
        %992 = vmatpush2.bf16.xpose.msra.mxu0 0
        %993 = vmatprep.subr.bf16.mxu0 0
        %994 = vmatpush2.bf16.xpose.msra.mxu0 0
        %995 = vmatprep.subr.bf16.mxu0 0
        %996 = vmatpush2.bf16.xpose.msra.mxu0 0
        %997 = vmatprep.subr.bf16.mxu0 0
        %998 = vmatpush2.bf16.xpose.msra.mxu0 0
        %999 = vmatprep.mubr.bf16.mxu0 0
        %1000 = vmatmul.mubr.bf16.gmra.mxu0 %v962
        %v1001 = vpop.f32.mrf.mxu0
        %v1002 = vadd.f32 %v843, %v1001
        %v1003 = vpop.f32.mrf.mxu0
        %v1004 = vpop.f32.mrf.mxu0
        %v1005 = vpop.f32.mrf.mxu0
        %1006 = vdwg.mxu0
        %v1007 = vsel %vm848, %v1002, -inf
        %1008 = vmax.xlane.f32.xlu0 %v1007
        %v1009 = vpop.xlane.xlu0 %1008
        %v1010 = vsub.f32 %v1002, %v1009
        %v1011 = vmul.f32 %v1010, 1.442695
        %v1012 = vpow.pop %v1011
        %v1013 = vsel %vm848, %v1012, 0.0
        %1014 = vadd.xlane.f32.xlu0 %v1013
        %v1015 = vpop.xlane.xlu0 %1014
        %v1016 = vrcp.pop %v1015
        %v1017 = vmul.f32 %v1012, %v1016
        %v1018 = vpack.c.bf16 %v1017, %v1017
        %1019 = vrot.lane.b32.xlu0 %v833, 56
        %v1020 = vpop.permute.xlu0 %1019
        %v1022 = vsel %vm848, %v1018, 0
        %v1025 = vsel %vm912, %v1020, 0
        %1027 = vmatprep.subr.bf16.mxu0 0
        %1028 = vmatpush1.bf16.msra.mxu0 0
        %1029 = vmatprep.subr.bf16.mxu0 0
        %1030 = vmatpush1.bf16.msra.mxu0 0
        %1031 = vmatprep.subr.bf16.mxu0 0
        %1032 = vmatpush1.bf16.msra.mxu0 0
        %1033 = vmatprep.subr.bf16.mxu0 0
        %1034 = vmatpush1.bf16.msra.mxu0 0
        %1035 = vmatprep.subr.bf16.mxu0 0
        %1036 = vmatpush1.bf16.msra.mxu0 0
        %1037 = vmatprep.subr.bf16.mxu0 0
        %1038 = vmatpush1.bf16.msra.mxu0 0
        %1039 = vmatprep.subr.bf16.mxu0 0
        %1040 = vmatpush1.bf16.msra.mxu0 0
        %1041 = vmatprep.subr.bf16.mxu0 0
        %1042 = vmatpush1.bf16.msra.mxu0 %v1025
        %1043 = vmatprep.subr.bf16.mxu0 0
        %1044 = vmatpush2.bf16.msra.mxu0 0
        %1045 = vmatprep.subr.bf16.mxu0 0
        %1046 = vmatpush2.bf16.msra.mxu0 0
        %1047 = vmatprep.subr.bf16.mxu0 0
        %1048 = vmatpush2.bf16.msra.mxu0 0
        %1049 = vmatprep.subr.bf16.mxu0 0
        %1050 = vmatpush2.bf16.msra.mxu0 0
        %1051 = vmatprep.subr.bf16.mxu0 0
        %1052 = vmatpush2.bf16.msra.mxu0 0
        %1053 = vmatprep.subr.bf16.mxu0 0
        %1054 = vmatpush2.bf16.msra.mxu0 0
        %1055 = vmatprep.subr.bf16.mxu0 0
        %1056 = vmatpush2.bf16.msra.mxu0 0
        %1057 = vmatprep.subr.bf16.mxu0 0
        %1058 = vmatpush2.bf16.msra.mxu0 0
        %1059 = vmatprep.mubr.bf16.mxu0 0
        %1060 = vmatmul.mubr.bf16.gmra.mxu0 %v1022
        %v1061 = vpop.f32.mrf.mxu0
        %v1062 = vadd.f32 0.0, %v1061
        %v1063 = vpop.f32.mrf.mxu0
        %v1064 = vpop.f32.mrf.mxu0
        %v1065 = vpop.f32.mrf.mxu0
        %1066 = vdwg.mxu0
        %v1067 = vpack.c.bf16 %v1062, %v1062
        %v1069 = vsel %vm848, %v1067, 0
        %v1072 = vsel %vm912, %v836, 0
        %1074 = vmatprep.subr.bf16.mxu0 0
        %1075 = vmatpush1.bf16.msra.mxu0 0
        %1076 = vmatprep.subr.bf16.mxu0 0
        %1077 = vmatpush1.bf16.msra.mxu0 0
        %1078 = vmatprep.subr.bf16.mxu0 0
        %1079 = vmatpush1.bf16.msra.mxu0 0
        %1080 = vmatprep.subr.bf16.mxu0 0
        %1081 = vmatpush1.bf16.msra.mxu0 0
        %1082 = vmatprep.subr.bf16.mxu0 0
        %1083 = vmatpush1.bf16.msra.mxu0 0
        %1084 = vmatprep.subr.bf16.mxu0 0
        %1085 = vmatpush1.bf16.msra.mxu0 0
        %1086 = vmatprep.subr.bf16.mxu0 0
        %1087 = vmatpush1.bf16.msra.mxu0 0
        %1088 = vmatprep.subr.bf16.mxu0 0
        %1089 = vmatpush1.bf16.msra.mxu0 %v1072
        %1090 = vmatprep.subr.bf16.mxu0 0
        %1091 = vmatpush2.bf16.msra.mxu0 0
        %1092 = vmatprep.subr.bf16.mxu0 0
        %1093 = vmatpush2.bf16.msra.mxu0 0
        %1094 = vmatprep.subr.bf16.mxu0 0
        %1095 = vmatpush2.bf16.msra.mxu0 0
        %1096 = vmatprep.subr.bf16.mxu0 0
        %1097 = vmatpush2.bf16.msra.mxu0 0
        %1098 = vmatprep.subr.bf16.mxu0 0
        %1099 = vmatpush2.bf16.msra.mxu0 0
        %1100 = vmatprep.subr.bf16.mxu0 0
        %1101 = vmatpush2.bf16.msra.mxu0 0
        %1102 = vmatprep.subr.bf16.mxu0 0
        %1103 = vmatpush2.bf16.msra.mxu0 0
        %1104 = vmatprep.subr.bf16.mxu0 0
        %1105 = vmatpush2.bf16.msra.mxu0 0
        %1106 = vmatprep.mubr.bf16.mxu0 0
        %1107 = vmatmul.mubr.bf16.gmra.mxu0 %v1069
        %v1108 = vpop.f32.mrf.mxu0
        %v1109 = vadd.f32 0.0, %v1108
        %v1110 = vpop.f32.mrf.mxu0
        %v1111 = vpop.f32.mrf.mxu0
        %v1112 = vpop.f32.mrf.mxu0
        %1113 = vdwg.mxu0
        %v1115 = vsel %vm848, %v956, 0
        %v1118 = vsel %vm912, %v835, 0
        %1120 = vmatprep.subr.bf16.mxu0 0
        %1121 = vmatpush1.bf16.msra.mxu0 0
        %1122 = vmatprep.subr.bf16.mxu0 0
        %1123 = vmatpush1.bf16.msra.mxu0 0
        %1124 = vmatprep.subr.bf16.mxu0 0
        %1125 = vmatpush1.bf16.msra.mxu0 0
        %1126 = vmatprep.subr.bf16.mxu0 0
        %1127 = vmatpush1.bf16.msra.mxu0 0
        %1128 = vmatprep.subr.bf16.mxu0 0
        %1129 = vmatpush1.bf16.msra.mxu0 0
        %1130 = vmatprep.subr.bf16.mxu0 0
        %1131 = vmatpush1.bf16.msra.mxu0 0
        %1132 = vmatprep.subr.bf16.mxu0 0
        %1133 = vmatpush1.bf16.msra.mxu0 0
        %1134 = vmatprep.subr.bf16.mxu0 0
        %1135 = vmatpush1.bf16.msra.mxu0 %v1118
        %1136 = vmatprep.subr.bf16.mxu0 0
        %1137 = vmatpush2.bf16.msra.mxu0 0
        %1138 = vmatprep.subr.bf16.mxu0 0
        %1139 = vmatpush2.bf16.msra.mxu0 0
        %1140 = vmatprep.subr.bf16.mxu0 0
        %1141 = vmatpush2.bf16.msra.mxu0 0
        %1142 = vmatprep.subr.bf16.mxu0 0
        %1143 = vmatpush2.bf16.msra.mxu0 0
        %1144 = vmatprep.subr.bf16.mxu0 0
        %1145 = vmatpush2.bf16.msra.mxu0 0
        %1146 = vmatprep.subr.bf16.mxu0 0
        %1147 = vmatpush2.bf16.msra.mxu0 0
        %1148 = vmatprep.subr.bf16.mxu0 0
        %1149 = vmatpush2.bf16.msra.mxu0 0
        %1150 = vmatprep.subr.bf16.mxu0 0
        %1151 = vmatpush2.bf16.msra.mxu0 0
        %1152 = vmatprep.mubr.bf16.mxu0 0
        %1153 = vmatmul.mubr.bf16.gmra.mxu0 %v1115
        %v1154 = vpop.f32.mrf.mxu0
        %v1155 = vadd.f32 %v1109, %v1154
        %v1156 = vpop.f32.mrf.mxu0
        %v1157 = vpop.f32.mrf.mxu0
        %v1158 = vpop.f32.mrf.mxu0
        %1159 = vdwg.mxu0
        %1160 = vrot.lane.b32.xlu0 %v833, 112
        %v1161 = vpop.permute.xlu0 %1160
        %1162 = vrot.lane.b32.xlu0 %v833, 80
        %v1163 = vpop.permute.xlu0 %1162
        %v1165 = vsel %vm848, %v1161, 0
        %v1168 = vsel %vm848, %v1163, 0
        %1170 = vmatprep.subr.bf16.mxu0 0
        %1171 = vmatpush1.bf16.xpose.msra.mxu0 0
        %1172 = vmatprep.subr.bf16.mxu0 0
        %1173 = vmatpush1.bf16.xpose.msra.mxu0 0
        %1174 = vmatprep.subr.bf16.mxu0 0
        %1175 = vmatpush1.bf16.xpose.msra.mxu0 0
        %1176 = vmatprep.subr.bf16.mxu0 0
        %1177 = vmatpush1.bf16.xpose.msra.mxu0 0
        %1178 = vmatprep.subr.bf16.mxu0 0
        %1179 = vmatpush1.bf16.xpose.msra.mxu0 0
        %1180 = vmatprep.subr.bf16.mxu0 0
        %1181 = vmatpush1.bf16.xpose.msra.mxu0 0
        %1182 = vmatprep.subr.bf16.mxu0 0
        %1183 = vmatpush1.bf16.xpose.msra.mxu0 0
        %1184 = vmatprep.subr.bf16.mxu0 0
        %1185 = vmatpush1.bf16.xpose.msra.mxu0 %v1168
        %1186 = vmatprep.subr.bf16.mxu0 0
        %1187 = vmatpush2.bf16.xpose.msra.mxu0 0
        %1188 = vmatprep.subr.bf16.mxu0 0
        %1189 = vmatpush2.bf16.xpose.msra.mxu0 0
        %1190 = vmatprep.subr.bf16.mxu0 0
        %1191 = vmatpush2.bf16.xpose.msra.mxu0 0
        %1192 = vmatprep.subr.bf16.mxu0 0
        %1193 = vmatpush2.bf16.xpose.msra.mxu0 0
        %1194 = vmatprep.subr.bf16.mxu0 0
        %1195 = vmatpush2.bf16.xpose.msra.mxu0 0
        %1196 = vmatprep.subr.bf16.mxu0 0
        %1197 = vmatpush2.bf16.xpose.msra.mxu0 0
        %1198 = vmatprep.subr.bf16.mxu0 0
        %1199 = vmatpush2.bf16.xpose.msra.mxu0 0
        %1200 = vmatprep.subr.bf16.mxu0 0
        %1201 = vmatpush2.bf16.xpose.msra.mxu0 0
        %1202 = vmatprep.mubr.bf16.mxu0 0
        %1203 = vmatmul.mubr.bf16.gmra.mxu0 %v1165
        %v1204 = vpop.f32.mrf.mxu0
        %v1205 = vadd.f32 %v843, %v1204
        %v1206 = vpop.f32.mrf.mxu0
        %v1207 = vpop.f32.mrf.mxu0
        %v1208 = vpop.f32.mrf.mxu0
        %1209 = vdwg.mxu0
        %v1210 = vsel %vm848, %v1205, -inf
        %1211 = vmax.xlane.f32.xlu0 %v1210
        %v1212 = vpop.xlane.xlu0 %1211
        %v1213 = vsub.f32 %v1205, %v1212
        %v1214 = vmul.f32 %v1213, 1.442695
        %v1215 = vpow.pop %v1214
        %v1216 = vsel %vm848, %v1215, 0.0
        %1217 = vadd.xlane.f32.xlu0 %v1216
        %v1218 = vpop.xlane.xlu0 %1217
        %v1219 = vrcp.pop %v1218
        %v1220 = vmul.f32 %v1215, %v1219
        %v1221 = vpack.c.bf16 %v1220, %v1220
        %1222 = vrot.lane.b32.xlu0 %v833, 48
        %v1223 = vpop.permute.xlu0 %1222
        %v1225 = vsel %vm848, %v1221, 0
        %v1228 = vsel %vm912, %v1223, 0
        %1230 = vmatprep.subr.bf16.mxu0 0
        %1231 = vmatpush1.bf16.msra.mxu0 0
        %1232 = vmatprep.subr.bf16.mxu0 0
        %1233 = vmatpush1.bf16.msra.mxu0 0
        %1234 = vmatprep.subr.bf16.mxu0 0
        %1235 = vmatpush1.bf16.msra.mxu0 0
        %1236 = vmatprep.subr.bf16.mxu0 0
        %1237 = vmatpush1.bf16.msra.mxu0 0
        %1238 = vmatprep.subr.bf16.mxu0 0
        %1239 = vmatpush1.bf16.msra.mxu0 0
        %1240 = vmatprep.subr.bf16.mxu0 0
        %1241 = vmatpush1.bf16.msra.mxu0 0
        %1242 = vmatprep.subr.bf16.mxu0 0
        %1243 = vmatpush1.bf16.msra.mxu0 0
        %1244 = vmatprep.subr.bf16.mxu0 0
        %1245 = vmatpush1.bf16.msra.mxu0 %v1228
        %1246 = vmatprep.subr.bf16.mxu0 0
        %1247 = vmatpush2.bf16.msra.mxu0 0
        %1248 = vmatprep.subr.bf16.mxu0 0
        %1249 = vmatpush2.bf16.msra.mxu0 0
        %1250 = vmatprep.subr.bf16.mxu0 0
        %1251 = vmatpush2.bf16.msra.mxu0 0
        %1252 = vmatprep.subr.bf16.mxu0 0
        %1253 = vmatpush2.bf16.msra.mxu0 0
        %1254 = vmatprep.subr.bf16.mxu0 0
        %1255 = vmatpush2.bf16.msra.mxu0 0
        %1256 = vmatprep.subr.bf16.mxu0 0
        %1257 = vmatpush2.bf16.msra.mxu0 0
        %1258 = vmatprep.subr.bf16.mxu0 0
        %1259 = vmatpush2.bf16.msra.mxu0 0
        %1260 = vmatprep.subr.bf16.mxu0 0
        %1261 = vmatpush2.bf16.msra.mxu0 0
        %1262 = vmatprep.mubr.bf16.mxu0 0
        %1263 = vmatmul.mubr.bf16.gmra.mxu0 %v1225
        %v1264 = vpop.f32.mrf.mxu0
        %v1265 = vadd.f32 0.0, %v1264
        %v1266 = vpop.f32.mrf.mxu0
        %v1267 = vpop.f32.mrf.mxu0
        %v1268 = vpop.f32.mrf.mxu0
        %1269 = vdwg.mxu0
        %v1270 = vpack.c.bf16 %v1265, %v1265
        %v1272 = vsel %vm848, %v1270, 0
        %v1275 = vsel %vm912, %v837, 0
        %1277 = vmatprep.subr.bf16.mxu0 0
        %1278 = vmatpush1.bf16.msra.mxu0 0
        %1279 = vmatprep.subr.bf16.mxu0 0
        %1280 = vmatpush1.bf16.msra.mxu0 0
        %1281 = vmatprep.subr.bf16.mxu0 0
        %1282 = vmatpush1.bf16.msra.mxu0 0
        %1283 = vmatprep.subr.bf16.mxu0 0
        %1284 = vmatpush1.bf16.msra.mxu0 0
        %1285 = vmatprep.subr.bf16.mxu0 0
        %1286 = vmatpush1.bf16.msra.mxu0 0
        %1287 = vmatprep.subr.bf16.mxu0 0
        %1288 = vmatpush1.bf16.msra.mxu0 0
        %1289 = vmatprep.subr.bf16.mxu0 0
        %1290 = vmatpush1.bf16.msra.mxu0 0
        %1291 = vmatprep.subr.bf16.mxu0 0
        %1292 = vmatpush1.bf16.msra.mxu0 %v1275
        %1293 = vmatprep.subr.bf16.mxu0 0
        %1294 = vmatpush2.bf16.msra.mxu0 0
        %1295 = vmatprep.subr.bf16.mxu0 0
        %1296 = vmatpush2.bf16.msra.mxu0 0
        %1297 = vmatprep.subr.bf16.mxu0 0
        %1298 = vmatpush2.bf16.msra.mxu0 0
        %1299 = vmatprep.subr.bf16.mxu0 0
        %1300 = vmatpush2.bf16.msra.mxu0 0
        %1301 = vmatprep.subr.bf16.mxu0 0
        %1302 = vmatpush2.bf16.msra.mxu0 0
        %1303 = vmatprep.subr.bf16.mxu0 0
        %1304 = vmatpush2.bf16.msra.mxu0 0
        %1305 = vmatprep.subr.bf16.mxu0 0
        %1306 = vmatpush2.bf16.msra.mxu0 0
        %1307 = vmatprep.subr.bf16.mxu0 0
        %1308 = vmatpush2.bf16.msra.mxu0 0
        %1309 = vmatprep.mubr.bf16.mxu0 0
        %1310 = vmatmul.mubr.bf16.gmra.mxu0 %v1272
        %v1311 = vpop.f32.mrf.mxu0
        %v1312 = vadd.f32 0.0, %v1311
        %v1313 = vpop.f32.mrf.mxu0
        %v1314 = vpop.f32.mrf.mxu0
        %v1315 = vpop.f32.mrf.mxu0
        %1316 = vdwg.mxu0
        %v1317 = vadd.f32 %v1155, %v1312
        %1318 = vrot.lane.b32.xlu0 %v833, 104
        %v1319 = vpop.permute.xlu0 %1318
        %1320 = vrot.lane.b32.xlu0 %v833, 72
        %v1321 = vpop.permute.xlu0 %1320
        %v1323 = vsel %vm848, %v1319, 0
        %v1326 = vsel %vm848, %v1321, 0
        %1328 = vmatprep.subr.bf16.mxu0 0
        %1329 = vmatpush1.bf16.xpose.msra.mxu0 0
        %1330 = vmatprep.subr.bf16.mxu0 0
        %1331 = vmatpush1.bf16.xpose.msra.mxu0 0
        %1332 = vmatprep.subr.bf16.mxu0 0
        %1333 = vmatpush1.bf16.xpose.msra.mxu0 0
        %1334 = vmatprep.subr.bf16.mxu0 0
        %1335 = vmatpush1.bf16.xpose.msra.mxu0 0
        %1336 = vmatprep.subr.bf16.mxu0 0
        %1337 = vmatpush1.bf16.xpose.msra.mxu0 0
        %1338 = vmatprep.subr.bf16.mxu0 0
        %1339 = vmatpush1.bf16.xpose.msra.mxu0 0
        %1340 = vmatprep.subr.bf16.mxu0 0
        %1341 = vmatpush1.bf16.xpose.msra.mxu0 0
        %1342 = vmatprep.subr.bf16.mxu0 0
        %1343 = vmatpush1.bf16.xpose.msra.mxu0 %v1326
        %1344 = vmatprep.subr.bf16.mxu0 0
        %1345 = vmatpush2.bf16.xpose.msra.mxu0 0
        %1346 = vmatprep.subr.bf16.mxu0 0
        %1347 = vmatpush2.bf16.xpose.msra.mxu0 0
        %1348 = vmatprep.subr.bf16.mxu0 0
        %1349 = vmatpush2.bf16.xpose.msra.mxu0 0
        %1350 = vmatprep.subr.bf16.mxu0 0
        %1351 = vmatpush2.bf16.xpose.msra.mxu0 0
        %1352 = vmatprep.subr.bf16.mxu0 0
        %1353 = vmatpush2.bf16.xpose.msra.mxu0 0
        %1354 = vmatprep.subr.bf16.mxu0 0
        %1355 = vmatpush2.bf16.xpose.msra.mxu0 0
        %1356 = vmatprep.subr.bf16.mxu0 0
        %1357 = vmatpush2.bf16.xpose.msra.mxu0 0
        %1358 = vmatprep.subr.bf16.mxu0 0
        %1359 = vmatpush2.bf16.xpose.msra.mxu0 0
        %1360 = vmatprep.mubr.bf16.mxu0 0
        %1361 = vmatmul.mubr.bf16.gmra.mxu0 %v1323
        %v1362 = vpop.f32.mrf.mxu0
        %v1363 = vadd.f32 %v843, %v1362
        %v1364 = vpop.f32.mrf.mxu0
        %v1365 = vpop.f32.mrf.mxu0
        %v1366 = vpop.f32.mrf.mxu0
        %1367 = vdwg.mxu0
        %v1368 = vsel %vm848, %v1363, -inf
        %1369 = vmax.xlane.f32.xlu0 %v1368
        %v1370 = vpop.xlane.xlu0 %1369
        %v1371 = vsub.f32 %v1363, %v1370
        %v1372 = vmul.f32 %v1371, 1.442695
        %v1373 = vpow.pop %v1372
        %v1374 = vsel %vm848, %v1373, 0.0
        %1375 = vadd.xlane.f32.xlu0 %v1374
        %v1376 = vpop.xlane.xlu0 %1375
        %v1377 = vrcp.pop %v1376
        %v1378 = vmul.f32 %v1373, %v1377
        %v1379 = vpack.c.bf16 %v1378, %v1378
        %1380 = vrot.lane.b32.xlu0 %v833, 40
        %v1381 = vpop.permute.xlu0 %1380
        %v1383 = vsel %vm848, %v1379, 0
        %v1386 = vsel %vm912, %v1381, 0
        %1388 = vmatprep.subr.bf16.mxu0 0
        %1389 = vmatpush1.bf16.msra.mxu0 0
        %1390 = vmatprep.subr.bf16.mxu0 0
        %1391 = vmatpush1.bf16.msra.mxu0 0
        %1392 = vmatprep.subr.bf16.mxu0 0
        %1393 = vmatpush1.bf16.msra.mxu0 0
        %1394 = vmatprep.subr.bf16.mxu0 0
        %1395 = vmatpush1.bf16.msra.mxu0 0
        %1396 = vmatprep.subr.bf16.mxu0 0
        %1397 = vmatpush1.bf16.msra.mxu0 0
        %1398 = vmatprep.subr.bf16.mxu0 0
        %1399 = vmatpush1.bf16.msra.mxu0 0
        %1400 = vmatprep.subr.bf16.mxu0 0
        %1401 = vmatpush1.bf16.msra.mxu0 0
        %1402 = vmatprep.subr.bf16.mxu0 0
        %1403 = vmatpush1.bf16.msra.mxu0 %v1386
        %1404 = vmatprep.subr.bf16.mxu0 0
        %1405 = vmatpush2.bf16.msra.mxu0 0
        %1406 = vmatprep.subr.bf16.mxu0 0
        %1407 = vmatpush2.bf16.msra.mxu0 0
        %1408 = vmatprep.subr.bf16.mxu0 0
        %1409 = vmatpush2.bf16.msra.mxu0 0
        %1410 = vmatprep.subr.bf16.mxu0 0
        %1411 = vmatpush2.bf16.msra.mxu0 0
        %1412 = vmatprep.subr.bf16.mxu0 0
        %1413 = vmatpush2.bf16.msra.mxu0 0
        %1414 = vmatprep.subr.bf16.mxu0 0
        %1415 = vmatpush2.bf16.msra.mxu0 0
        %1416 = vmatprep.subr.bf16.mxu0 0
        %1417 = vmatpush2.bf16.msra.mxu0 0
        %1418 = vmatprep.subr.bf16.mxu0 0
        %1419 = vmatpush2.bf16.msra.mxu0 0
        %1420 = vmatprep.mubr.bf16.mxu0 0
        %1421 = vmatmul.mubr.bf16.gmra.mxu0 %v1383
        %v1422 = vpop.f32.mrf.mxu0
        %v1423 = vadd.f32 0.0, %v1422
        %v1424 = vpop.f32.mrf.mxu0
        %v1425 = vpop.f32.mrf.mxu0
        %v1426 = vpop.f32.mrf.mxu0
        %1427 = vdwg.mxu0
        %v1428 = vpack.c.bf16 %v1423, %v1423
        %v1430 = vsel %vm848, %v1428, 0
        %v1433 = vsel %vm912, %v838, 0
        %1435 = vmatprep.subr.bf16.mxu0 0
        %1436 = vmatpush1.bf16.msra.mxu0 0
        %1437 = vmatprep.subr.bf16.mxu0 0
        %1438 = vmatpush1.bf16.msra.mxu0 0
        %1439 = vmatprep.subr.bf16.mxu0 0
        %1440 = vmatpush1.bf16.msra.mxu0 0
        %1441 = vmatprep.subr.bf16.mxu0 0
        %1442 = vmatpush1.bf16.msra.mxu0 0
        %1443 = vmatprep.subr.bf16.mxu0 0
        %1444 = vmatpush1.bf16.msra.mxu0 0
        %1445 = vmatprep.subr.bf16.mxu0 0
        %1446 = vmatpush1.bf16.msra.mxu0 0
        %1447 = vmatprep.subr.bf16.mxu0 0
        %1448 = vmatpush1.bf16.msra.mxu0 0
        %1449 = vmatprep.subr.bf16.mxu0 0
        %1450 = vmatpush1.bf16.msra.mxu0 %v1433
        %1451 = vmatprep.subr.bf16.mxu0 0
        %1452 = vmatpush2.bf16.msra.mxu0 0
        %1453 = vmatprep.subr.bf16.mxu0 0
        %1454 = vmatpush2.bf16.msra.mxu0 0
        %1455 = vmatprep.subr.bf16.mxu0 0
        %1456 = vmatpush2.bf16.msra.mxu0 0
        %1457 = vmatprep.subr.bf16.mxu0 0
        %1458 = vmatpush2.bf16.msra.mxu0 0
        %1459 = vmatprep.subr.bf16.mxu0 0
        %1460 = vmatpush2.bf16.msra.mxu0 0
        %1461 = vmatprep.subr.bf16.mxu0 0
        %1462 = vmatpush2.bf16.msra.mxu0 0
        %1463 = vmatprep.subr.bf16.mxu0 0
        %1464 = vmatpush2.bf16.msra.mxu0 0
        %1465 = vmatprep.subr.bf16.mxu0 0
        %1466 = vmatpush2.bf16.msra.mxu0 0
        %1467 = vmatprep.mubr.bf16.mxu0 0
        %1468 = vmatmul.mubr.bf16.gmra.mxu0 %v1430
        %v1469 = vpop.f32.mrf.mxu0
        %v1470 = vadd.f32 0.0, %v1469
        %v1471 = vpop.f32.mrf.mxu0
        %v1472 = vpop.f32.mrf.mxu0
        %v1473 = vpop.f32.mrf.mxu0
        %1474 = vdwg.mxu0
        %v1475 = vadd.f32 %v1317, %v1470
        %v1476 = vadd.f32 %v764, %v1475
        %v1477 = vld [vmem:[%s726] sm:$0x1]
        %v1479 = vlaneseq
        %v1480 = vshrl.u32 %v1479, 7
        %v1481 = vsub.s32 0, %v1480
        %v1482 = vrot.slane %v1477, %v1481
        %v1484 = vadd.f32 %v1476, %v1482
        %v1485 = vld [vmem:[%s729] sm:$0x1]
        %v1486 = vld [vmem:[%s732] sm:$0x1]
        %v1487 = vsel %vm789, %v1484, 0.0
        %1488 = vadd.xlane.f32.xlu0 %v1487
        %v1489 = vpop.xlane.xlu0 %1488
        %v1490 = vrcp.pop 32.0
        %v1491 = vmul.f32 %v1489, %v1490
        %v1492 = vsub.f32 %v1484, %v1491
        %v1493 = vmul.f32 %v1492, %v1492
        %v1494 = vsel %vm789, %v1493, 0.0
        %1495 = vadd.xlane.f32.xlu0 %v1494
        %v1496 = vpop.xlane.xlu0 %1495
        %v1497 = vmul.f32 %v1496, %v1490
        %v1498 = vadd.f32 %v1497, 1e-12
        %v1499 = vrsqrt.pop %v1498
        %v1500 = vmul.f32 %v1492, %v1499
        %v1502 = vlaneseq
        %v1503 = vshrl.u32 %v1502, 7
        %v1504 = vsub.s32 0, %v1503
        %v1505 = vrot.slane %v1485, %v1504
        %v1507 = vmul.f32 %v1500, %v1505
        %v1509 = vlaneseq
        %v1510 = vshrl.u32 %v1509, 7
        %v1511 = vsub.s32 0, %v1510
        %v1512 = vrot.slane %v1486, %v1511
        %v1514 = vadd.f32 %v1507, %v1512
        %v1515 = vpack.c.bf16 %v1514, %v1514
        %v1516 = vld [vmem:[%s737] sm:$0xf]
        %v1517 = vld [vmem:[%s737 + $0x4] sm:$0xf]
        %v1518 = vld [vmem:[%s737 + $0x8] sm:$0xf]
        %v1519 = vld [vmem:[%s737 + $0xc] sm:$0xf]
        %v1520 = vld [vmem:[%s740] sm:$0x1]
        %v1522 = vlaneseq
        %v1523 = vshrl.u32 %v1522, 7
        %v1524 = vsub.s32 0, %v1523
        %v1525 = vrot.slane %v1520, %v1524
        %v1531 = vunpack.c.l.b16 %v1516
        %v1532 = vunpack.c.l.b16 %v1517
        %v1533 = vunpack.c.l.b16 %v1518
        %v1534 = vunpack.c.l.b16 %v1519
        %v1535 = vpack.c.b16 %v1532, %v1531
        %v1536 = vpack.c.b16 %v1534, %v1533
        %v1540 = vsel %vm789, %v1515, 0
        %1542 = vmatprep.subr.bf16.mxu0 0
        %1543 = vmatpush1.bf16.msra.mxu0 0
        %1544 = vmatprep.subr.bf16.mxu0 0
        %1545 = vmatpush1.bf16.msra.mxu0 0
        %1546 = vmatprep.subr.bf16.mxu0 0
        %1547 = vmatpush1.bf16.msra.mxu0 0
        %1548 = vmatprep.subr.bf16.mxu0 0
        %1549 = vmatpush1.bf16.msra.mxu0 0
        %1550 = vmatprep.subr.bf16.mxu0 0
        %1551 = vmatpush1.bf16.msra.mxu0 0
        %1552 = vmatprep.subr.bf16.mxu0 0
        %1553 = vmatpush1.bf16.msra.mxu0 0
        %1554 = vmatprep.subr.bf16.mxu0 0
        %1555 = vmatpush1.bf16.msra.mxu0 %v1536
        %1556 = vmatprep.subr.bf16.mxu0 0
        %1557 = vmatpush1.bf16.msra.mxu0 %v1535
        %1558 = vmatprep.subr.bf16.mxu0 0
        %1559 = vmatpush2.bf16.msra.mxu0 0
        %1560 = vmatprep.subr.bf16.mxu0 0
        %1561 = vmatpush2.bf16.msra.mxu0 0
        %1562 = vmatprep.subr.bf16.mxu0 0
        %1563 = vmatpush2.bf16.msra.mxu0 0
        %1564 = vmatprep.subr.bf16.mxu0 0
        %1565 = vmatpush2.bf16.msra.mxu0 0
        %1566 = vmatprep.subr.bf16.mxu0 0
        %1567 = vmatpush2.bf16.msra.mxu0 0
        %1568 = vmatprep.subr.bf16.mxu0 0
        %1569 = vmatpush2.bf16.msra.mxu0 0
        %1570 = vmatprep.subr.bf16.mxu0 0
        %1571 = vmatpush2.bf16.msra.mxu0 0
        %1572 = vmatprep.subr.bf16.mxu0 0
        %1573 = vmatpush2.bf16.msra.mxu0 0
        %1574 = vmatprep.mubr.bf16.mxu0 0
        %1575 = vmatmul.mubr.bf16.gmra.mxu0 %v1540
        %v1576 = vpop.f32.mrf.mxu0
        %v1577 = vadd.f32 %v1525, %v1576
        %v1578 = vpop.f32.mrf.mxu0
        %v1579 = vpop.f32.mrf.mxu0
        %v1580 = vpop.f32.mrf.mxu0
        %1581 = vdwg.mxu0
        %v1582 = vmul.f32 %v1577, %v1577
        %v1583 = vmul.f32 %v1577, %v1582
        %v1584 = vmul.f32 %v1583, 0.044715
        %v1585 = vadd.f32 %v1577, %v1584
        %v1586 = vmul.f32 %v1585, 0.7978846
        %v1587 = vtanh.pop %v1586
        %v1588 = vadd.f32 %v1587, 1.0
        %v1589 = vmul.f32 %v1588, 0.5
        %v1590 = vmul.f32 %v1577, %v1589
        %v1591 = vpack.c.bf16 %v1590, %v1590
        %v1592 = vld [vmem:[%s745] sm:$0xf]
        %v1593 = vld [vmem:[%s745 + $0x4] sm:$0xf]
        %v1594 = vld [vmem:[%s745 + $0x8] sm:$0xf]
        %v1595 = vld [vmem:[%s745 + $0xc] sm:$0xf]
        %v1596 = vld [vmem:[%s745 + $0x10] sm:$0xf]
        %v1597 = vld [vmem:[%s745 + $0x14] sm:$0xf]
        %v1598 = vld [vmem:[%s745 + $0x18] sm:$0xf]
        %v1599 = vld [vmem:[%s745 + $0x1c] sm:$0xf]
        %v1600 = vld [vmem:[%s748] sm:$0x1]
        %v1602 = vlaneseq
        %v1603 = vshrl.u32 %v1602, 7
        %v1604 = vsub.s32 0, %v1603
        %v1605 = vrot.slane %v1600, %v1604
        %v1615 = vunpack.c.l.b16 %v1592
        %v1616 = vunpack.c.l.b16 %v1593
        %v1617 = vunpack.c.l.b16 %v1594
        %v1618 = vunpack.c.l.b16 %v1595
        %v1619 = vunpack.c.l.b16 %v1596
        %v1620 = vunpack.c.l.b16 %v1597
        %v1621 = vunpack.c.l.b16 %v1598
        %v1622 = vunpack.c.l.b16 %v1599
        %v1623 = vpack.c.b16 %v1616, %v1615
        %v1624 = vpack.c.b16 %v1618, %v1617
        %v1625 = vpack.c.b16 %v1620, %v1619
        %v1626 = vpack.c.b16 %v1622, %v1621
        %vm1631 = vcmask 523264
        %v1633 = vsel %vm1631, %v1591, 0
        %1635 = vmatprep.subr.bf16.mxu0 0
        %1636 = vmatpush1.bf16.msra.mxu0 0
        %1637 = vmatprep.subr.bf16.mxu0 0
        %1638 = vmatpush1.bf16.msra.mxu0 0
        %1639 = vmatprep.subr.bf16.mxu0 0
        %1640 = vmatpush1.bf16.msra.mxu0 0
        %1641 = vmatprep.subr.bf16.mxu0 0
        %1642 = vmatpush1.bf16.msra.mxu0 0
        %1643 = vmatprep.subr.bf16.mxu0 0
        %1644 = vmatpush1.bf16.msra.mxu0 %v1626
        %1645 = vmatprep.subr.bf16.mxu0 0
        %1646 = vmatpush1.bf16.msra.mxu0 %v1625
        %1647 = vmatprep.subr.bf16.mxu0 0
        %1648 = vmatpush1.bf16.msra.mxu0 %v1624
        %1649 = vmatprep.subr.bf16.mxu0 0
        %1650 = vmatpush1.bf16.msra.mxu0 %v1623
        %1651 = vmatprep.subr.bf16.mxu0 0
        %1652 = vmatpush2.bf16.msra.mxu0 0
        %1653 = vmatprep.subr.bf16.mxu0 0
        %1654 = vmatpush2.bf16.msra.mxu0 0
        %1655 = vmatprep.subr.bf16.mxu0 0
        %1656 = vmatpush2.bf16.msra.mxu0 0
        %1657 = vmatprep.subr.bf16.mxu0 0
        %1658 = vmatpush2.bf16.msra.mxu0 0
        %1659 = vmatprep.subr.bf16.mxu0 0
        %1660 = vmatpush2.bf16.msra.mxu0 0
        %1661 = vmatprep.subr.bf16.mxu0 0
        %1662 = vmatpush2.bf16.msra.mxu0 0
        %1663 = vmatprep.subr.bf16.mxu0 0
        %1664 = vmatpush2.bf16.msra.mxu0 0
        %1665 = vmatprep.subr.bf16.mxu0 0
        %1666 = vmatpush2.bf16.msra.mxu0 0
        %1667 = vmatprep.mubr.bf16.mxu0 0
        %1668 = vmatmul.mubr.bf16.gmra.mxu0 %v1633
        %v1669 = vpop.f32.mrf.mxu0
        %v1670 = vadd.f32 %v1605, %v1669
        %v1671 = vpop.f32.mrf.mxu0
        %v1672 = vpop.f32.mrf.mxu0
        %v1673 = vpop.f32.mrf.mxu0
        %1674 = vdwg.mxu0
        %v1675 = vadd.f32 %v1514, %v1670
        %v1676 = vld [vmem:[%s751] sm:$0x1]
        %v1677 = vld [vmem:[%s754] sm:$0x1]
        %v1678 = vsel %vm789, %v1675, 0.0
        %1679 = vadd.xlane.f32.xlu0 %v1678
        %v1680 = vpop.xlane.xlu0 %1679
        %v1681 = vmul.f32 %v1680, %v1490
        %v1682 = vsub.f32 %v1675, %v1681
        %v1683 = vmul.f32 %v1682, %v1682
        %v1684 = vsel %vm789, %v1683, 0.0
        %1685 = vadd.xlane.f32.xlu0 %v1684
        %v1686 = vpop.xlane.xlu0 %1685
        %v1687 = vmul.f32 %v1686, %v1490
        %v1688 = vadd.f32 %v1687, 1e-12
        %v1689 = vrsqrt.pop %v1688
        %v1690 = vmul.f32 %v1682, %v1689
        %v1692 = vlaneseq
        %v1693 = vshrl.u32 %v1692, 7
        %v1694 = vsub.s32 0, %v1693
        %v1695 = vrot.slane %v1676, %v1694
        %v1697 = vmul.f32 %v1690, %v1695
        %v1699 = vlaneseq
        %v1700 = vshrl.u32 %v1699, 7
        %v1701 = vsub.s32 0, %v1700
        %v1702 = vrot.slane %v1677, %v1701
        %v1704 = vadd.f32 %v1697, %v1702
        %1705 = vst.msk [vmem:[#allocation2] sm:$0xff] %vm789, %v1704
        %p1706 = scmp.eq.s32.totalorder %s39, 1
        // Predicated region
        $region93: #{tpu_custom_call.1} parent=83 // pred_check
          %p1707 = pneg %p1706
        $region94: #{tpu_custom_call.1} parent=83 // pred_check_branch
          %1709 = sbr.rel (%p1707) target = $region96
        $region95: #{tpu_custom_call.1} parent=83 // pred_region
          %v1710 = vld [vmem:[#allocation2] sm:$0xff]
          %v1711 = vld [vmem:[%s14] sm:$0x1]
          %v1712 = vmul.f32 %v1710, %v1711
          %vm1713 = vcmask 253952
          %v1714 = vsel %vm1713, %v1712, 0.0
          %1715 = vadd.xlane.f32.xlu0 %v1714
          %v1716 = vpop.xlane.xlu0 %1715
          %s1717 = sld [smem:[#allocation3]]
          %v1718 = vstv %s1717
          %v1719 = vadd.f32 %v1716, %v1718
          %1720 = vst [vmem:[%s707] sm:$0x1] %v1719
        $region96: #{tpu_custom_call.1} parent=83 // pred_fallthru
          _
        %s1721 = sand.u32 %s460, 1
        %s1722 = scalar_lea.sflag [#allocation6], %s1721
        %s1723 = sand.u32 %s460, 1
        %s1724 = scalar_lea.vmem [#allocation7], %s1723
        // Predicated region
        $region97: #{tpu_custom_call.1} parent=83 // pred_check
          %p1725 = pneg %p470
        $region98: #{tpu_custom_call.1} parent=83 // pred_check_branch
          %1727 = sbr.rel (%p1725) target = $region100
        $region99: #{tpu_custom_call.1} parent=83 // pred_region
          %s1729 = ssub.s32 16, 16
          %1730 = vsyncadd %s1722, %s1729
          %s1731 = smul.addr %s38, 16
          %s1732 = scalar_lea.hbm %s16, %s1731
          %s1734 = sshll.u32 %s1724, 4
          %s1735 = int_to_ptr.vmem [resolvable:$true] %s1734
          %1737 = dma.vmem_to_hbm [thread:$0]  %s1735, 16, %s1732, %s1722
        $region100: #{tpu_custom_call.1} parent=83 // pred_fallthru
          _
      $region84: #{tpu_custom_call.1} parent=5 // pred_fallthru
        _
      %p1738 = scmp.le.s32.totalorder 2, %s29
      // Predicated region
      $region101: #{tpu_custom_call.1} parent=5 // pred_check
        %p1739 = pneg %p1738
      $region102: #{tpu_custom_call.1} parent=5 // pred_check_branch
        %1741 = sbr.rel (%p1739) target = $region104
      $region103: #{tpu_custom_call.1} parent=5 // pred_region
        %s1742 = ssub.s32 %s29, 2
        // Predicated region
        $region105: #{tpu_custom_call.1} parent=103 // pred_check
          %p1743 = pneg %p476
        $region106: #{tpu_custom_call.1} parent=103 // pred_check_branch
          %1745 = sbr.rel (%p1743) target = $region108
        $region107: #{tpu_custom_call.1} parent=103 // pred_region
          %s1746 = sand.u32 %s461, 1
          %s1747 = scalar_lea.sflag [#allocation6], %s1746
          %s1748 = sand.u32 %s461, 1
          %s1749 = scalar_lea.vmem [#allocation7], %s1748
          %1750 = dma.done %s1747, 16
        $region108: #{tpu_custom_call.1} parent=103 // pred_fallthru
          _
      $region104: #{tpu_custom_call.1} parent=5 // pred_fallthru
        _
    $region6: #{tpu_custom_call.1} parent=1 // loop_footer
      %s33 = sadd.s32 1, %s29
    $region7: #{tpu_custom_call.1} parent=1 // loop_footer_branch
      %28 = sbr.rel target = $region3
    $region8: #{tpu_custom_call.1} parent=1 // loop_exit
      _
    %1751 = vsyncpa [#allocation5], 1
    %s1752 = scalar_lea.sflag [#allocation5], 1
    %1753 = vsyncpa %s1752, 1
    %1754 = vsyncpa [#allocation6], 1
    %s1755 = scalar_lea.sflag [#allocation6], 1
    %1756 = vsyncpa %s1755, 1

</llo_original>
